<compile_context>
chip_gen: v7x
topology: tpu7x:2x2x1
jax: 0.10.0
libtpu: 0.0.40
codegen_flags: <defaults>
</compile_context>

<pallas_src>
import jax
import jax.numpy as jnp
from jax.experimental import pallas as pl
from jax.experimental.pallas import tpu as pltpu

BATCH = 2
SEQ = 16
INPUT = 3
HIDDEN = 20
H_PAD = 32              # padded hidden so 4*H_PAD == 128 lanes (one vreg row)
G = 4 * H_PAD           # 128
OUT_FEAT = 3
OUT_PAD = 128           # lane-dense output width
TAIL = 15               # output[:, -15:, :]

# Constant-slab row layout (all rows are 128 lanes wide).
ROW_WHH = 0             # [0, 32)   W_hh^T (gate-padded, i/f/o rows pre-scaled)
ROW_WLIN = 32           # [32, 64)  W_lin^T (hidden-padded, out-padded to 128)
ROW_WIH = 64            # [64, 67)  W_ih^T (gate-padded, i/f/o rows pre-scaled)
ROW_B = 67              # [67]      folded bias b_ih + b_hh (padded, pre-scaled)
ROW_BLIN = 68           # [68]      Linear bias (padded to 128)
SLAB_ROWS = 72          # padded to a multiple of 8 sublanes


def lstm_linear_kernel(x_ref, w_ref, out_ref, tail_sc):
    # Static slab views (one input DMA for all constants).
    whh_t = w_ref[ROW_WHH:ROW_WHH + H_PAD, :]          # (32, 128)
    wlin_t = w_ref[ROW_WLIN:ROW_WLIN + H_PAD, :]       # (32, 128)
    wih_t = w_ref[ROW_WIH:ROW_WIH + INPUT, :]          # (3, 128)
    bias = w_ref[ROW_B:ROW_B + 1, :]                   # (1, 128)
    blin = w_ref[ROW_BLIN:ROW_BLIN + 1, :]             # (1, 128)

    # Hoisted input projection + folded (pre-scaled) bias: one dot for the
    # whole sequence, no sequential dependence.
    gates_x = (jnp.dot(x_ref[...], wih_t,
                       preferred_element_type=jnp.float32)
               + bias)                                  # (SEQ*B, 128)

    # Hoisted per-lane affine that turns the full-width tanh into sigmoid on
    # the i/f/o lanes and identity on the g lanes (weights pre-scaled by 0.5).
    lane = jax.lax.broadcasted_iota(jnp.int32, (1, G), 1)
    is_g = jnp.logical_and(lane >= 2 * H_PAD, lane < 3 * H_PAD)
    scale = jnp.broadcast_to(jnp.where(is_g, 1.0, 0.5).astype(jnp.float32),
                             (BATCH, G))
    shift = jnp.broadcast_to(jnp.where(is_g, 0.0, 0.5).astype(jnp.float32),
                             (BATCH, G))

    # h_0 = c_0 = 0 (PyTorch default); state lives in vregs, not VMEM.
    h = jnp.zeros((BATCH, H_PAD), jnp.float32)
    c = jnp.zeros((BATCH, H_PAD), jnp.float32)

    start = SEQ - TAIL
    for t in range(SEQ):                                # static unroll
        # One MXU dot per step on the recurrence chain.
        # TODO(synk): hold whh_t in MXU staging regs across all 16 steps via
        # pltpu.matmul_push_rhs / matmul_acc_lhs / matmul_pop (skipped here
        # to keep lowering simple and guaranteed).
        gates = gates_x[t * BATCH:(t + 1) * BATCH, :] + jnp.dot(
            h, whh_t, preferred_element_type=jnp.float32)        # (B, 128)

        # One full-vreg tanh instead of 3 sigmoids + 1 tanh.
        a = jnp.tanh(gates) * scale + shift                      # (B, 128)
        i = a[:, 0 * H_PAD:1 * H_PAD]
        f = a[:, 1 * H_PAD:2 * H_PAD]
        g = a[:, 2 * H_PAD:3 * H_PAD]
        o = a[:, 3 * H_PAD:4 * H_PAD]

        c = f * c + i * g
        h = o * jnp.tanh(c)

        if t >= start:
            # Stage tail hidden states; off the recurrence critical path.
            r0 = (t - start) * BATCH
            tail_sc[r0:r0 + BATCH, :] = h

    # Single Linear(20 -> 3, padded to 128 lanes) over all kept timesteps and
    # one unmasked lane-dense (30, 128) output store.
    out_ref[...] = (jnp.dot(tail_sc[...], wlin_t,
                            preferred_element_type=jnp.float32)
                    + blin)


def prepare_params(w_ih, w_hh, b_ih, b_hh, w_lin, b_lin):
    """One-time weight layout plumbing (hoisted out of the per-call path)."""
    def pad_and_scale(w):
        # Pad each of the 4 stacked gate blocks (rows) from HIDDEN to H_PAD
        # and pre-scale the i, f, o blocks by 0.5 (sigmoid-as-tanh fold).
        blocks = jnp.split(w, 4, axis=0)
        pad = [(0, H_PAD - HIDDEN)] + [(0, 0)] * (w.ndim - 1)
        out = []
        for gi, blk in enumerate(blocks):
            blk = jnp.pad(blk, pad)
            if gi != 2:                      # i, f, o scaled; g untouched
                blk = blk * 0.5
            out.append(blk)
        return jnp.concatenate(out, axis=0)

    wih_t = pad_and_scale(w_ih).T.astype(jnp.float32)                 # (3, 128)
    whh_p = pad_and_scale(w_hh)                                       # (128, 20)
    whh_t = jnp.pad(whh_p, ((0, 0), (0, H_PAD - HIDDEN))).T           # (32, 128)
    whh_t = whh_t.astype(jnp.float32)
    b = pad_and_scale(b_ih + b_hh).reshape(1, G).astype(jnp.float32)  # (1, 128)
    wlin_t = jnp.pad(w_lin, ((0, OUT_PAD - OUT_FEAT),
                             (0, H_PAD - HIDDEN))).T.astype(jnp.float32)  # (32, 128)
    blin = jnp.pad(b_lin, (0, OUT_PAD - OUT_FEAT)).astype(jnp.float32)    # (128,)

    slab = jnp.zeros((SLAB_ROWS, G), jnp.float32)
    slab = slab.at[ROW_WHH:ROW_WHH + H_PAD].set(whh_t)
    slab = slab.at[ROW_WLIN:ROW_WLIN + H_PAD].set(wlin_t)
    slab = slab.at[ROW_WIH:ROW_WIH + INPUT].set(wih_t)
    slab = slab.at[ROW_B].set(b[0])
    slab = slab.at[ROW_BLIN].set(blin)
    return slab


@jax.jit
def rnn_forward(x, slab):
    # Time-major flattened input: row index = t*BATCH + b.
    x_tm = jnp.swapaxes(x, 0, 1).reshape(SEQ * BATCH, INPUT).astype(jnp.float32)

    vmem = pl.BlockSpec(memory_space=pltpu.MemorySpace.VMEM)
    out_tm = pl.pallas_call(
        lstm_linear_kernel,
        out_shape=jax.ShapeDtypeStruct((TAIL * BATCH, OUT_PAD), jnp.float32),
        in_specs=[vmem, vmem],
        out_specs=vmem,
        scratch_shapes=[pltpu.VMEM((TAIL * BATCH, H_PAD), jnp.float32)],
        cost_estimate=pl.CostEstimate(
            flops=540_000, transcendentals=8_192, bytes_accessed=60_000),
    )(x_tm, slab)

    # Back to (batch, TAIL, OUT_FEAT) — drop the lane padding.
    out = out_tm[:, :OUT_FEAT]
    return jnp.swapaxes(out.reshape(TAIL, BATCH, OUT_FEAT), 0, 1)


def rnn_reference(x, w_ih, w_hh, b_ih, b_hh, w_lin, b_lin):
    """Pure-JAX reference (matches torch.nn.LSTM + nn.Linear)."""
    def step(carry, x_t):
        h, c = carry
        gates = x_t @ w_ih.T + b_ih + h @ w_hh.T + b_hh
        i, f, g, o = jnp.split(gates, 4, axis=-1)
        i, f, o = jax.nn.sigmoid(i), jax.nn.sigmoid(f), jax.nn.sigmoid(o)
        g = jnp.tanh(g)
        c = f * c + i * g
        h = o * jnp.tanh(c)
        return (h, c), h

    h0 = jnp.zeros((x.shape[0], HIDDEN), jnp.float32)
    c0 = jnp.zeros((x.shape[0], HIDDEN), jnp.float32)
    _, hs = jax.lax.scan(step, (h0, c0), jnp.swapaxes(x, 0, 1))
    output = jnp.swapaxes(hs, 0, 1)                 # (B, SEQ, HIDDEN)
    tail = output[:, -TAIL:, :]
    return tail @ w_lin.T + b_lin


if __name__ == "__main__":
    key = jax.random.PRNGKey(0)
    kx, k1, k2, k3, k4, k5, k6 = jax.random.split(key, 7)

    # Deterministic param init, same shapes as the PyTorch module.
    bound = 1.0 / jnp.sqrt(jnp.float32(HIDDEN))
    w_ih = jax.random.uniform(k1, (4 * HIDDEN, INPUT), jnp.float32, -bound, bound)
    w_hh = jax.random.uniform(k2, (4 * HIDDEN, HIDDEN), jnp.float32, -bound, bound)
    b_ih = jax.random.uniform(k3, (4 * HIDDEN,), jnp.float32, -bound, bound)
    b_hh = jax.random.uniform(k4, (4 * HIDDEN,), jnp.float32, -bound, bound)
    w_lin = jax.random.uniform(k5, (OUT_FEAT, HIDDEN), jnp.float32, -bound, bound)
    b_lin = jax.random.uniform(k6, (OUT_FEAT,), jnp.float32, -bound, bound)

    x = jax.random.normal(kx, (BATCH, SEQ, INPUT), jnp.float32)

    # One-time weight prep (kept out of the per-call path).
    slab = jax.block_until_ready(
        prepare_params(w_ih, w_hh, b_ih, b_hh, w_lin, b_lin))

    out = rnn_forward(x, slab)
    out = jax.block_until_ready(out)

    ref = rnn_reference(x, w_ih, w_hh, b_ih, b_hh, w_lin, b_lin)
    assert out.shape == (BATCH, TAIL, OUT_FEAT), out.shape
    assert jnp.allclose(out, ref, atol=1e-4, rtol=1e-4), "mismatch vs reference"

    print("KERNEL_OK")
</pallas_src>

<mosaic_0001>
module attributes {stable_mosaic.version = 11 : i64} {
  func.func @lstm_linear_kernel(%arg0: memref<32x3xf32, #tpu.memory_space<vmem>>, %arg1: memref<72x128xf32, #tpu.memory_space<vmem>>, %arg2: memref<30x128xf32, #tpu.memory_space<vmem>>, %arg3: memref<30x32xf32, #tpu.memory_space<vmem>>) attributes {dimension_semantics = [], scalar_prefetch = 0 : i64, scratch_operands = 1 : i64, tpu.core_type = #tpu.core_type<tc>} {
    %c0 = arith.constant 0 : index
    %c0_0 = arith.constant 0 : index
    %0 = vector.load %arg1[%c0, %c0_0] : memref<72x128xf32, #tpu.memory_space<vmem>>, vector<32x128xf32>
    %c32 = arith.constant 32 : index
    %c0_1 = arith.constant 0 : index
    %1 = vector.load %arg1[%c32, %c0_1] : memref<72x128xf32, #tpu.memory_space<vmem>>, vector<32x128xf32>
    %c64 = arith.constant 64 : index
    %c0_2 = arith.constant 0 : index
    %2 = vector.load %arg1[%c64, %c0_2] : memref<72x128xf32, #tpu.memory_space<vmem>>, vector<3x128xf32>
    %c67 = arith.constant 67 : index
    %c0_3 = arith.constant 0 : index
    %3 = vector.load %arg1[%c67, %c0_3] : memref<72x128xf32, #tpu.memory_space<vmem>>, vector<1x128xf32>
    %c68 = arith.constant 68 : index
    %c0_4 = arith.constant 0 : index
    %4 = vector.load %arg1[%c68, %c0_4] : memref<72x128xf32, #tpu.memory_space<vmem>>, vector<1x128xf32>
    %c0_5 = arith.constant 0 : index
    %c0_6 = arith.constant 0 : index
    %5 = vector.load %arg0[%c0_5, %c0_6] : memref<32x3xf32, #tpu.memory_space<vmem>>, vector<32x3xf32>
    %cst = arith.constant dense<0.000000e+00> : vector<32x128xf32>
    %6 = tpu.matmul %5, %2, %cst {dimension_numbers = #tpu.dot_dimension_numbers<[1], [0], [0], [1], [0, 0, 1, 1], [], []>} : vector<32x3xf32>, vector<3x128xf32>, vector<32x128xf32> -> vector<32x128xf32>
    %7 = vector.broadcast %3 : vector<1x128xf32> to vector<32x128xf32>
    %8 = arith.addf %6, %7 : vector<32x128xf32>
    %9 = tpu.iota {dimensions = array<i32: 1>} : vector<1x128xi32>
    %c64_i32 = arith.constant 64 : i32
    %10 = vector.broadcast %c64_i32 : i32 to vector<1x128xi32>
    %11 = arith.cmpi sge, %9, %10 : vector<1x128xi32>
    %c96_i32 = arith.constant 96 : i32
    %12 = vector.broadcast %c96_i32 : i32 to vector<1x128xi32>
    %13 = arith.cmpi slt, %9, %12 : vector<1x128xi32>
    %14 = arith.andi %11, %13 : vector<1x128xi1>
    %cst_7 = arith.constant 1.000000e+00 : f32
    %cst_8 = arith.constant 5.000000e-01 : f32
    %15 = vector.broadcast %cst_7 : f32 to vector<1x128xf32>
    %16 = vector.broadcast %cst_8 : f32 to vector<1x128xf32>
    %17 = arith.select %14, %15, %16 : vector<1x128xi1>, vector<1x128xf32>
    %18 = vector.shape_cast %17 : vector<1x128xf32> to vector<1x128xf32>
    %19 = vector.broadcast %18 : vector<1x128xf32> to vector<2x128xf32>
    %cst_9 = arith.constant 0.000000e+00 : f32
    %cst_10 = arith.constant 5.000000e-01 : f32
    %20 = vector.broadcast %cst_9 : f32 to vector<1x128xf32>
    %21 = vector.broadcast %cst_10 : f32 to vector<1x128xf32>
    %22 = arith.select %14, %20, %21 : vector<1x128xi1>, vector<1x128xf32>
    %23 = vector.shape_cast %22 : vector<1x128xf32> to vector<1x128xf32>
    %24 = vector.broadcast %23 : vector<1x128xf32> to vector<2x128xf32>
    %cst_11 = arith.constant 0.000000e+00 : f32
    %25 = vector.broadcast %cst_11 : f32 to vector<2x32xf32>
    %cst_12 = arith.constant 0.000000e+00 : f32
    %26 = vector.broadcast %cst_12 : f32 to vector<2x32xf32>
    %27 = vector.extract_strided_slice %8 {offsets = [0, 0], sizes = [2, 128], strides = [1, 1]} : vector<32x128xf32> to vector<2x128xf32>
    %cst_13 = arith.constant dense<0.000000e+00> : vector<2x128xf32>
    %28 = tpu.matmul %25, %0, %cst_13 {dimension_numbers = #tpu.dot_dimension_numbers<[1], [0], [0], [1], [0, 0, 1, 1], [], []>} : vector<2x32xf32>, vector<32x128xf32>, vector<2x128xf32> -> vector<2x128xf32>
    %29 = arith.addf %27, %28 : vector<2x128xf32>
    %30 = math.tanh %29 : vector<2x128xf32>
    %31 = arith.mulf %30, %19 : vector<2x128xf32>
    %32 = arith.addf %31, %24 : vector<2x128xf32>
    %33 = vector.extract_strided_slice %32 {offsets = [0, 0], sizes = [2, 32], strides = [1, 1]} : vector<2x128xf32> to vector<2x32xf32>
    %34 = vector.extract_strided_slice %32 {offsets = [0, 32], sizes = [2, 32], strides = [1, 1]} : vector<2x128xf32> to vector<2x32xf32>
    %35 = vector.extract_strided_slice %32 {offsets = [0, 64], sizes = [2, 32], strides = [1, 1]} : vector<2x128xf32> to vector<2x32xf32>
    %36 = vector.extract_strided_slice %32 {offsets = [0, 96], sizes = [2, 32], strides = [1, 1]} : vector<2x128xf32> to vector<2x32xf32>
    %37 = arith.mulf %34, %26 : vector<2x32xf32>
    %38 = arith.mulf %33, %35 : vector<2x32xf32>
    %39 = arith.addf %37, %38 : vector<2x32xf32>
    %40 = math.tanh %39 : vector<2x32xf32>
    %41 = arith.mulf %36, %40 : vector<2x32xf32>
    %42 = vector.extract_strided_slice %8 {offsets = [2, 0], sizes = [2, 128], strides = [1, 1]} : vector<32x128xf32> to vector<2x128xf32>
    %cst_14 = arith.constant dense<0.000000e+00> : vector<2x128xf32>
    %43 = tpu.matmul %41, %0, %cst_14 {dimension_numbers = #tpu.dot_dimension_numbers<[1], [0], [0], [1], [0, 0, 1, 1], [], []>} : vector<2x32xf32>, vector<32x128xf32>, vector<2x128xf32> -> vector<2x128xf32>
    %44 = arith.addf %42, %43 : vector<2x128xf32>
    %45 = math.tanh %44 : vector<2x128xf32>
    %46 = arith.mulf %45, %19 : vector<2x128xf32>
    %47 = arith.addf %46, %24 : vector<2x128xf32>
    %48 = vector.extract_strided_slice %47 {offsets = [0, 0], sizes = [2, 32], strides = [1, 1]} : vector<2x128xf32> to vector<2x32xf32>
    %49 = vector.extract_strided_slice %47 {offsets = [0, 32], sizes = [2, 32], strides = [1, 1]} : vector<2x128xf32> to vector<2x32xf32>
    %50 = vector.extract_strided_slice %47 {offsets = [0, 64], sizes = [2, 32], strides = [1, 1]} : vector<2x128xf32> to vector<2x32xf32>
    %51 = vector.extract_strided_slice %47 {offsets = [0, 96], sizes = [2, 32], strides = [1, 1]} : vector<2x128xf32> to vector<2x32xf32>
    %52 = arith.mulf %49, %39 : vector<2x32xf32>
    %53 = arith.mulf %48, %50 : vector<2x32xf32>
    %54 = arith.addf %52, %53 : vector<2x32xf32>
    %55 = math.tanh %54 : vector<2x32xf32>
    %56 = arith.mulf %51, %55 : vector<2x32xf32>
    %c0_15 = arith.constant 0 : index
    %c0_16 = arith.constant 0 : index
    %57 = vector.load %arg3[%c0_15, %c0_16] : memref<30x32xf32, #tpu.memory_space<vmem>>, vector<2x32xf32>
    tpu.vector_store %arg3[%c0_15, %c0_16], %56 {strides = array<i32>} : memref<30x32xf32, #tpu.memory_space<vmem>>, vector<2x32xf32>,
    %58 = vector.extract_strided_slice %8 {offsets = [4, 0], sizes = [2, 128], strides = [1, 1]} : vector<32x128xf32> to vector<2x128xf32>
    %cst_17 = arith.constant dense<0.000000e+00> : vector<2x128xf32>
    %59 = tpu.matmul %56, %0, %cst_17 {dimension_numbers = #tpu.dot_dimension_numbers<[1], [0], [0], [1], [0, 0, 1, 1], [], []>} : vector<2x32xf32>, vector<32x128xf32>, vector<2x128xf32> -> vector<2x128xf32>
    %60 = arith.addf %58, %59 : vector<2x128xf32>
    %61 = math.tanh %60 : vector<2x128xf32>
    %62 = arith.mulf %61, %19 : vector<2x128xf32>
    %63 = arith.addf %62, %24 : vector<2x128xf32>
    %64 = vector.extract_strided_slice %63 {offsets = [0, 0], sizes = [2, 32], strides = [1, 1]} : vector<2x128xf32> to vector<2x32xf32>
    %65 = vector.extract_strided_slice %63 {offsets = [0, 32], sizes = [2, 32], strides = [1, 1]} : vector<2x128xf32> to vector<2x32xf32>
    %66 = vector.extract_strided_slice %63 {offsets = [0, 64], sizes = [2, 32], strides = [1, 1]} : vector<2x128xf32> to vector<2x32xf32>
    %67 = vector.extract_strided_slice %63 {offsets = [0, 96], sizes = [2, 32], strides = [1, 1]} : vector<2x128xf32> to vector<2x32xf32>
    %68 = arith.mulf %65, %54 : vector<2x32xf32>
    %69 = arith.mulf %64, %66 : vector<2x32xf32>
    %70 = arith.addf %68, %69 : vector<2x32xf32>
    %71 = math.tanh %70 : vector<2x32xf32>
    %72 = arith.mulf %67, %71 : vector<2x32xf32>
    %c2 = arith.constant 2 : index
    %c0_18 = arith.constant 0 : index
    %73 = vector.load %arg3[%c2, %c0_18] : memref<30x32xf32, #tpu.memory_space<vmem>>, vector<2x32xf32>
    tpu.vector_store %arg3[%c2, %c0_18], %72 {strides = array<i32>} : memref<30x32xf32, #tpu.memory_space<vmem>>, vector<2x32xf32>,
    %74 = vector.extract_strided_slice %8 {offsets = [6, 0], sizes = [2, 128], strides = [1, 1]} : vector<32x128xf32> to vector<2x128xf32>
    %cst_19 = arith.constant dense<0.000000e+00> : vector<2x128xf32>
    %75 = tpu.matmul %72, %0, %cst_19 {dimension_numbers = #tpu.dot_dimension_numbers<[1], [0], [0], [1], [0, 0, 1, 1], [], []>} : vector<2x32xf32>, vector<32x128xf32>, vector<2x128xf32> -> vector<2x128xf32>
    %76 = arith.addf %74, %75 : vector<2x128xf32>
    %77 = math.tanh %76 : vector<2x128xf32>
    %78 = arith.mulf %77, %19 : vector<2x128xf32>
    %79 = arith.addf %78, %24 : vector<2x128xf32>
    %80 = vector.extract_strided_slice %79 {offsets = [0, 0], sizes = [2, 32], strides = [1, 1]} : vector<2x128xf32> to vector<2x32xf32>
    %81 = vector.extract_strided_slice %79 {offsets = [0, 32], sizes = [2, 32], strides = [1, 1]} : vector<2x128xf32> to vector<2x32xf32>
    %82 = vector.extract_strided_slice %79 {offsets = [0, 64], sizes = [2, 32], strides = [1, 1]} : vector<2x128xf32> to vector<2x32xf32>
    %83 = vector.extract_strided_slice %79 {offsets = [0, 96], sizes = [2, 32], strides = [1, 1]} : vector<2x128xf32> to vector<2x32xf32>
    %84 = arith.mulf %81, %70 : vector<2x32xf32>
    %85 = arith.mulf %80, %82 : vector<2x32xf32>
    %86 = arith.addf %84, %85 : vector<2x32xf32>
    %87 = math.tanh %86 : vector<2x32xf32>
    %88 = arith.mulf %83, %87 : vector<2x32xf32>
    %c4 = arith.constant 4 : index
    %c0_20 = arith.constant 0 : index
    %89 = vector.load %arg3[%c4, %c0_20] : memref<30x32xf32, #tpu.memory_space<vmem>>, vector<2x32xf32>
    tpu.vector_store %arg3[%c4, %c0_20], %88 {strides = array<i32>} : memref<30x32xf32, #tpu.memory_space<vmem>>, vector<2x32xf32>,
    %90 = vector.extract_strided_slice %8 {offsets = [8, 0], sizes = [2, 128], strides = [1, 1]} : vector<32x128xf32> to vector<2x128xf32>
    %cst_21 = arith.constant dense<0.000000e+00> : vector<2x128xf32>
    %91 = tpu.matmul %88, %0, %cst_21 {dimension_numbers = #tpu.dot_dimension_numbers<[1], [0], [0], [1], [0, 0, 1, 1], [], []>} : vector<2x32xf32>, vector<32x128xf32>, vector<2x128xf32> -> vector<2x128xf32>
    %92 = arith.addf %90, %91 : vector<2x128xf32>
    %93 = math.tanh %92 : vector<2x128xf32>
    %94 = arith.mulf %93, %19 : vector<2x128xf32>
    %95 = arith.addf %94, %24 : vector<2x128xf32>
    %96 = vector.extract_strided_slice %95 {offsets = [0, 0], sizes = [2, 32], strides = [1, 1]} : vector<2x128xf32> to vector<2x32xf32>
    %97 = vector.extract_strided_slice %95 {offsets = [0, 32], sizes = [2, 32], strides = [1, 1]} : vector<2x128xf32> to vector<2x32xf32>
    %98 = vector.extract_strided_slice %95 {offsets = [0, 64], sizes = [2, 32], strides = [1, 1]} : vector<2x128xf32> to vector<2x32xf32>
    %99 = vector.extract_strided_slice %95 {offsets = [0, 96], sizes = [2, 32], strides = [1, 1]} : vector<2x128xf32> to vector<2x32xf32>
    %100 = arith.mulf %97, %86 : vector<2x32xf32>
    %101 = arith.mulf %96, %98 : vector<2x32xf32>
    %102 = arith.addf %100, %101 : vector<2x32xf32>
    %103 = math.tanh %102 : vector<2x32xf32>
    %104 = arith.mulf %99, %103 : vector<2x32xf32>
    %c6 = arith.constant 6 : index
    %c0_22 = arith.constant 0 : index
    %105 = vector.load %arg3[%c6, %c0_22] : memref<30x32xf32, #tpu.memory_space<vmem>>, vector<2x32xf32>
    tpu.vector_store %arg3[%c6, %c0_22], %104 {strides = array<i32>} : memref<30x32xf32, #tpu.memory_space<vmem>>, vector<2x32xf32>,
    %106 = vector.extract_strided_slice %8 {offsets = [10, 0], sizes = [2, 128], strides = [1, 1]} : vector<32x128xf32> to vector<2x128xf32>
    %cst_23 = arith.constant dense<0.000000e+00> : vector<2x128xf32>
    %107 = tpu.matmul %104, %0, %cst_23 {dimension_numbers = #tpu.dot_dimension_numbers<[1], [0], [0], [1], [0, 0, 1, 1], [], []>} : vector<2x32xf32>, vector<32x128xf32>, vector<2x128xf32> -> vector<2x128xf32>
    %108 = arith.addf %106, %107 : vector<2x128xf32>
    %109 = math.tanh %108 : vector<2x128xf32>
    %110 = arith.mulf %109, %19 : vector<2x128xf32>
    %111 = arith.addf %110, %24 : vector<2x128xf32>
    %112 = vector.extract_strided_slice %111 {offsets = [0, 0], sizes = [2, 32], strides = [1, 1]} : vector<2x128xf32> to vector<2x32xf32>
    %113 = vector.extract_strided_slice %111 {offsets = [0, 32], sizes = [2, 32], strides = [1, 1]} : vector<2x128xf32> to vector<2x32xf32>
    %114 = vector.extract_strided_slice %111 {offsets = [0, 64], sizes = [2, 32], strides = [1, 1]} : vector<2x128xf32> to vector<2x32xf32>
    %115 = vector.extract_strided_slice %111 {offsets = [0, 96], sizes = [2, 32], strides = [1, 1]} : vector<2x128xf32> to vector<2x32xf32>
    %116 = arith.mulf %113, %102 : vector<2x32xf32>
    %117 = arith.mulf %112, %114 : vector<2x32xf32>
    %118 = arith.addf %116, %117 : vector<2x32xf32>
    %119 = math.tanh %118 : vector<2x32xf32>
    %120 = arith.mulf %115, %119 : vector<2x32xf32>
    %c8 = arith.constant 8 : index
    %c0_24 = arith.constant 0 : index
    %121 = vector.load %arg3[%c8, %c0_24] : memref<30x32xf32, #tpu.memory_space<vmem>>, vector<2x32xf32>
    tpu.vector_store %arg3[%c8, %c0_24], %120 {strides = array<i32>} : memref<30x32xf32, #tpu.memory_space<vmem>>, vector<2x32xf32>,
    %122 = vector.extract_strided_slice %8 {offsets = [12, 0], sizes = [2, 128], strides = [1, 1]} : vector<32x128xf32> to vector<2x128xf32>
    %cst_25 = arith.constant dense<0.000000e+00> : vector<2x128xf32>
    %123 = tpu.matmul %120, %0, %cst_25 {dimension_numbers = #tpu.dot_dimension_numbers<[1], [0], [0], [1], [0, 0, 1, 1], [], []>} : vector<2x32xf32>, vector<32x128xf32>, vector<2x128xf32> -> vector<2x128xf32>
    %124 = arith.addf %122, %123 : vector<2x128xf32>
    %125 = math.tanh %124 : vector<2x128xf32>
    %126 = arith.mulf %125, %19 : vector<2x128xf32>
    %127 = arith.addf %126, %24 : vector<2x128xf32>
    %128 = vector.extract_strided_slice %127 {offsets = [0, 0], sizes = [2, 32], strides = [1, 1]} : vector<2x128xf32> to vector<2x32xf32>
    %129 = vector.extract_strided_slice %127 {offsets = [0, 32], sizes = [2, 32], strides = [1, 1]} : vector<2x128xf32> to vector<2x32xf32>
    %130 = vector.extract_strided_slice %127 {offsets = [0, 64], sizes = [2, 32], strides = [1, 1]} : vector<2x128xf32> to vector<2x32xf32>
    %131 = vector.extract_strided_slice %127 {offsets = [0, 96], sizes = [2, 32], strides = [1, 1]} : vector<2x128xf32> to vector<2x32xf32>
    %132 = arith.mulf %129, %118 : vector<2x32xf32>
    %133 = arith.mulf %128, %130 : vector<2x32xf32>
    %134 = arith.addf %132, %133 : vector<2x32xf32>
    %135 = math.tanh %134 : vector<2x32xf32>
    %136 = arith.mulf %131, %135 : vector<2x32xf32>
    %c10 = arith.constant 10 : index
    %c0_26 = arith.constant 0 : index
    %137 = vector.load %arg3[%c10, %c0_26] : memref<30x32xf32, #tpu.memory_space<vmem>>, vector<2x32xf32>
    tpu.vector_store %arg3[%c10, %c0_26], %136 {strides = array<i32>} : memref<30x32xf32, #tpu.memory_space<vmem>>, vector<2x32xf32>,
    %138 = vector.extract_strided_slice %8 {offsets = [14, 0], sizes = [2, 128], strides = [1, 1]} : vector<32x128xf32> to vector<2x128xf32>
    %cst_27 = arith.constant dense<0.000000e+00> : vector<2x128xf32>
    %139 = tpu.matmul %136, %0, %cst_27 {dimension_numbers = #tpu.dot_dimension_numbers<[1], [0], [0], [1], [0, 0, 1, 1], [], []>} : vector<2x32xf32>, vector<32x128xf32>, vector<2x128xf32> -> vector<2x128xf32>
    %140 = arith.addf %138, %139 : vector<2x128xf32>
    %141 = math.tanh %140 : vector<2x128xf32>
    %142 = arith.mulf %141, %19 : vector<2x128xf32>
    %143 = arith.addf %142, %24 : vector<2x128xf32>
    %144 = vector.extract_strided_slice %143 {offsets = [0, 0], sizes = [2, 32], strides = [1, 1]} : vector<2x128xf32> to vector<2x32xf32>
    %145 = vector.extract_strided_slice %143 {offsets = [0, 32], sizes = [2, 32], strides = [1, 1]} : vector<2x128xf32> to vector<2x32xf32>
    %146 = vector.extract_strided_slice %143 {offsets = [0, 64], sizes = [2, 32], strides = [1, 1]} : vector<2x128xf32> to vector<2x32xf32>
    %147 = vector.extract_strided_slice %143 {offsets = [0, 96], sizes = [2, 32], strides = [1, 1]} : vector<2x128xf32> to vector<2x32xf32>
    %148 = arith.mulf %145, %134 : vector<2x32xf32>
    %149 = arith.mulf %144, %146 : vector<2x32xf32>
    %150 = arith.addf %148, %149 : vector<2x32xf32>
    %151 = math.tanh %150 : vector<2x32xf32>
    %152 = arith.mulf %147, %151 : vector<2x32xf32>
    %c12 = arith.constant 12 : index
    %c0_28 = arith.constant 0 : index
    %153 = vector.load %arg3[%c12, %c0_28] : memref<30x32xf32, #tpu.memory_space<vmem>>, vector<2x32xf32>
    tpu.vector_store %arg3[%c12, %c0_28], %152 {strides = array<i32>} : memref<30x32xf32, #tpu.memory_space<vmem>>, vector<2x32xf32>,
    %154 = vector.extract_strided_slice %8 {offsets = [16, 0], sizes = [2, 128], strides = [1, 1]} : vector<32x128xf32> to vector<2x128xf32>
    %cst_29 = arith.constant dense<0.000000e+00> : vector<2x128xf32>
    %155 = tpu.matmul %152, %0, %cst_29 {dimension_numbers = #tpu.dot_dimension_numbers<[1], [0], [0], [1], [0, 0, 1, 1], [], []>} : vector<2x32xf32>, vector<32x128xf32>, vector<2x128xf32> -> vector<2x128xf32>
    %156 = arith.addf %154, %155 : vector<2x128xf32>
    %157 = math.tanh %156 : vector<2x128xf32>
    %158 = arith.mulf %157, %19 : vector<2x128xf32>
    %159 = arith.addf %158, %24 : vector<2x128xf32>
    %160 = vector.extract_strided_slice %159 {offsets = [0, 0], sizes = [2, 32], strides = [1, 1]} : vector<2x128xf32> to vector<2x32xf32>
    %161 = vector.extract_strided_slice %159 {offsets = [0, 32], sizes = [2, 32], strides = [1, 1]} : vector<2x128xf32> to vector<2x32xf32>
    %162 = vector.extract_strided_slice %159 {offsets = [0, 64], sizes = [2, 32], strides = [1, 1]} : vector<2x128xf32> to vector<2x32xf32>
    %163 = vector.extract_strided_slice %159 {offsets = [0, 96], sizes = [2, 32], strides = [1, 1]} : vector<2x128xf32> to vector<2x32xf32>
    %164 = arith.mulf %161, %150 : vector<2x32xf32>
    %165 = arith.mulf %160, %162 : vector<2x32xf32>
    %166 = arith.addf %164, %165 : vector<2x32xf32>
    %167 = math.tanh %166 : vector<2x32xf32>
    %168 = arith.mulf %163, %167 : vector<2x32xf32>
    %c14 = arith.constant 14 : index
    %c0_30 = arith.constant 0 : index
    %169 = vector.load %arg3[%c14, %c0_30] : memref<30x32xf32, #tpu.memory_space<vmem>>, vector<2x32xf32>
    tpu.vector_store %arg3[%c14, %c0_30], %168 {strides = array<i32>} : memref<30x32xf32, #tpu.memory_space<vmem>>, vector<2x32xf32>,
    %170 = vector.extract_strided_slice %8 {offsets = [18, 0], sizes = [2, 128], strides = [1, 1]} : vector<32x128xf32> to vector<2x128xf32>
    %cst_31 = arith.constant dense<0.000000e+00> : vector<2x128xf32>
    %171 = tpu.matmul %168, %0, %cst_31 {dimension_numbers = #tpu.dot_dimension_numbers<[1], [0], [0], [1], [0, 0, 1, 1], [], []>} : vector<2x32xf32>, vector<32x128xf32>, vector<2x128xf32> -> vector<2x128xf32>
    %172 = arith.addf %170, %171 : vector<2x128xf32>
    %173 = math.tanh %172 : vector<2x128xf32>
    %174 = arith.mulf %173, %19 : vector<2x128xf32>
    %175 = arith.addf %174, %24 : vector<2x128xf32>
    %176 = vector.extract_strided_slice %175 {offsets = [0, 0], sizes = [2, 32], strides = [1, 1]} : vector<2x128xf32> to vector<2x32xf32>
    %177 = vector.extract_strided_slice %175 {offsets = [0, 32], sizes = [2, 32], strides = [1, 1]} : vector<2x128xf32> to vector<2x32xf32>
    %178 = vector.extract_strided_slice %175 {offsets = [0, 64], sizes = [2, 32], strides = [1, 1]} : vector<2x128xf32> to vector<2x32xf32>
    %179 = vector.extract_strided_slice %175 {offsets = [0, 96], sizes = [2, 32], strides = [1, 1]} : vector<2x128xf32> to vector<2x32xf32>
    %180 = arith.mulf %177, %166 : vector<2x32xf32>
    %181 = arith.mulf %176, %178 : vector<2x32xf32>
    %182 = arith.addf %180, %181 : vector<2x32xf32>
    %183 = math.tanh %182 : vector<2x32xf32>
    %184 = arith.mulf %179, %183 : vector<2x32xf32>
    %c16 = arith.constant 16 : index
    %c0_32 = arith.constant 0 : index
    %185 = vector.load %arg3[%c16, %c0_32] : memref<30x32xf32, #tpu.memory_space<vmem>>, vector<2x32xf32>
    tpu.vector_store %arg3[%c16, %c0_32], %184 {strides = array<i32>} : memref<30x32xf32, #tpu.memory_space<vmem>>, vector<2x32xf32>,
    %186 = vector.extract_strided_slice %8 {offsets = [20, 0], sizes = [2, 128], strides = [1, 1]} : vector<32x128xf32> to vector<2x128xf32>
    %cst_33 = arith.constant dense<0.000000e+00> : vector<2x128xf32>
    %187 = tpu.matmul %184, %0, %cst_33 {dimension_numbers = #tpu.dot_dimension_numbers<[1], [0], [0], [1], [0, 0, 1, 1], [], []>} : vector<2x32xf32>, vector<32x128xf32>, vector<2x128xf32> -> vector<2x128xf32>
    %188 = arith.addf %186, %187 : vector<2x128xf32>
    %189 = math.tanh %188 : vector<2x128xf32>
    %190 = arith.mulf %189, %19 : vector<2x128xf32>
    %191 = arith.addf %190, %24 : vector<2x128xf32>
    %192 = vector.extract_strided_slice %191 {offsets = [0, 0], sizes = [2, 32], strides = [1, 1]} : vector<2x128xf32> to vector<2x32xf32>
    %193 = vector.extract_strided_slice %191 {offsets = [0, 32], sizes = [2, 32], strides = [1, 1]} : vector<2x128xf32> to vector<2x32xf32>
    %194 = vector.extract_strided_slice %191 {offsets = [0, 64], sizes = [2, 32], strides = [1, 1]} : vector<2x128xf32> to vector<2x32xf32>
    %195 = vector.extract_strided_slice %191 {offsets = [0, 96], sizes = [2, 32], strides = [1, 1]} : vector<2x128xf32> to vector<2x32xf32>
    %196 = arith.mulf %193, %182 : vector<2x32xf32>
    %197 = arith.mulf %192, %194 : vector<2x32xf32>
    %198 = arith.addf %196, %197 : vector<2x32xf32>
    %199 = math.tanh %198 : vector<2x32xf32>
    %200 = arith.mulf %195, %199 : vector<2x32xf32>
    %c18 = arith.constant 18 : index
    %c0_34 = arith.constant 0 : index
    %201 = vector.load %arg3[%c18, %c0_34] : memref<30x32xf32, #tpu.memory_space<vmem>>, vector<2x32xf32>
    tpu.vector_store %arg3[%c18, %c0_34], %200 {strides = array<i32>} : memref<30x32xf32, #tpu.memory_space<vmem>>, vector<2x32xf32>,
    %202 = vector.extract_strided_slice %8 {offsets = [22, 0], sizes = [2, 128], strides = [1, 1]} : vector<32x128xf32> to vector<2x128xf32>
    %cst_35 = arith.constant dense<0.000000e+00> : vector<2x128xf32>
    %203 = tpu.matmul %200, %0, %cst_35 {dimension_numbers = #tpu.dot_dimension_numbers<[1], [0], [0], [1], [0, 0, 1, 1], [], []>} : vector<2x32xf32>, vector<32x128xf32>, vector<2x128xf32> -> vector<2x128xf32>
    %204 = arith.addf %202, %203 : vector<2x128xf32>
    %205 = math.tanh %204 : vector<2x128xf32>
    %206 = arith.mulf %205, %19 : vector<2x128xf32>
    %207 = arith.addf %206, %24 : vector<2x128xf32>
    %208 = vector.extract_strided_slice %207 {offsets = [0, 0], sizes = [2, 32], strides = [1, 1]} : vector<2x128xf32> to vector<2x32xf32>
    %209 = vector.extract_strided_slice %207 {offsets = [0, 32], sizes = [2, 32], strides = [1, 1]} : vector<2x128xf32> to vector<2x32xf32>
    %210 = vector.extract_strided_slice %207 {offsets = [0, 64], sizes = [2, 32], strides = [1, 1]} : vector<2x128xf32> to vector<2x32xf32>
    %211 = vector.extract_strided_slice %207 {offsets = [0, 96], sizes = [2, 32], strides = [1, 1]} : vector<2x128xf32> to vector<2x32xf32>
    %212 = arith.mulf %209, %198 : vector<2x32xf32>
    %213 = arith.mulf %208, %210 : vector<2x32xf32>
    %214 = arith.addf %212, %213 : vector<2x32xf32>
    %215 = math.tanh %214 : vector<2x32xf32>
    %216 = arith.mulf %211, %215 : vector<2x32xf32>
    %c20 = arith.constant 20 : index
    %c0_36 = arith.constant 0 : index
    %217 = vector.load %arg3[%c20, %c0_36] : memref<30x32xf32, #tpu.memory_space<vmem>>, vector<2x32xf32>
    tpu.vector_store %arg3[%c20, %c0_36], %216 {strides = array<i32>} : memref<30x32xf32, #tpu.memory_space<vmem>>, vector<2x32xf32>,
    %218 = vector.extract_strided_slice %8 {offsets = [24, 0], sizes = [2, 128], strides = [1, 1]} : vector<32x128xf32> to vector<2x128xf32>
    %cst_37 = arith.constant dense<0.000000e+00> : vector<2x128xf32>
    %219 = tpu.matmul %216, %0, %cst_37 {dimension_numbers = #tpu.dot_dimension_numbers<[1], [0], [0], [1], [0, 0, 1, 1], [], []>} : vector<2x32xf32>, vector<32x128xf32>, vector<2x128xf32> -> vector<2x128xf32>
    %220 = arith.addf %218, %219 : vector<2x128xf32>
    %221 = math.tanh %220 : vector<2x128xf32>
    %222 = arith.mulf %221, %19 : vector<2x128xf32>
    %223 = arith.addf %222, %24 : vector<2x128xf32>
    %224 = vector.extract_strided_slice %223 {offsets = [0, 0], sizes = [2, 32], strides = [1, 1]} : vector<2x128xf32> to vector<2x32xf32>
    %225 = vector.extract_strided_slice %223 {offsets = [0, 32], sizes = [2, 32], strides = [1, 1]} : vector<2x128xf32> to vector<2x32xf32>
    %226 = vector.extract_strided_slice %223 {offsets = [0, 64], sizes = [2, 32], strides = [1, 1]} : vector<2x128xf32> to vector<2x32xf32>
    %227 = vector.extract_strided_slice %223 {offsets = [0, 96], sizes = [2, 32], strides = [1, 1]} : vector<2x128xf32> to vector<2x32xf32>
    %228 = arith.mulf %225, %214 : vector<2x32xf32>
    %229 = arith.mulf %224, %226 : vector<2x32xf32>
    %230 = arith.addf %228, %229 : vector<2x32xf32>
    %231 = math.tanh %230 : vector<2x32xf32>
    %232 = arith.mulf %227, %231 : vector<2x32xf32>
    %c22 = arith.constant 22 : index
    %c0_38 = arith.constant 0 : index
    %233 = vector.load %arg3[%c22, %c0_38] : memref<30x32xf32, #tpu.memory_space<vmem>>, vector<2x32xf32>
    tpu.vector_store %arg3[%c22, %c0_38], %232 {strides = array<i32>} : memref<30x32xf32, #tpu.memory_space<vmem>>, vector<2x32xf32>,
    %234 = vector.extract_strided_slice %8 {offsets = [26, 0], sizes = [2, 128], strides = [1, 1]} : vector<32x128xf32> to vector<2x128xf32>
    %cst_39 = arith.constant dense<0.000000e+00> : vector<2x128xf32>
    %235 = tpu.matmul %232, %0, %cst_39 {dimension_numbers = #tpu.dot_dimension_numbers<[1], [0], [0], [1], [0, 0, 1, 1], [], []>} : vector<2x32xf32>, vector<32x128xf32>, vector<2x128xf32> -> vector<2x128xf32>
    %236 = arith.addf %234, %235 : vector<2x128xf32>
    %237 = math.tanh %236 : vector<2x128xf32>
    %238 = arith.mulf %237, %19 : vector<2x128xf32>
    %239 = arith.addf %238, %24 : vector<2x128xf32>
    %240 = vector.extract_strided_slice %239 {offsets = [0, 0], sizes = [2, 32], strides = [1, 1]} : vector<2x128xf32> to vector<2x32xf32>
    %241 = vector.extract_strided_slice %239 {offsets = [0, 32], sizes = [2, 32], strides = [1, 1]} : vector<2x128xf32> to vector<2x32xf32>
    %242 = vector.extract_strided_slice %239 {offsets = [0, 64], sizes = [2, 32], strides = [1, 1]} : vector<2x128xf32> to vector<2x32xf32>
    %243 = vector.extract_strided_slice %239 {offsets = [0, 96], sizes = [2, 32], strides = [1, 1]} : vector<2x128xf32> to vector<2x32xf32>
    %244 = arith.mulf %241, %230 : vector<2x32xf32>
    %245 = arith.mulf %240, %242 : vector<2x32xf32>
    %246 = arith.addf %244, %245 : vector<2x32xf32>
    %247 = math.tanh %246 : vector<2x32xf32>
    %248 = arith.mulf %243, %247 : vector<2x32xf32>
    %c24 = arith.constant 24 : index
    %c0_40 = arith.constant 0 : index
    %249 = vector.load %arg3[%c24, %c0_40] : memref<30x32xf32, #tpu.memory_space<vmem>>, vector<2x32xf32>
    tpu.vector_store %arg3[%c24, %c0_40], %248 {strides = array<i32>} : memref<30x32xf32, #tpu.memory_space<vmem>>, vector<2x32xf32>,
    %250 = vector.extract_strided_slice %8 {offsets = [28, 0], sizes = [2, 128], strides = [1, 1]} : vector<32x128xf32> to vector<2x128xf32>
    %cst_41 = arith.constant dense<0.000000e+00> : vector<2x128xf32>
    %251 = tpu.matmul %248, %0, %cst_41 {dimension_numbers = #tpu.dot_dimension_numbers<[1], [0], [0], [1], [0, 0, 1, 1], [], []>} : vector<2x32xf32>, vector<32x128xf32>, vector<2x128xf32> -> vector<2x128xf32>
    %252 = arith.addf %250, %251 : vector<2x128xf32>
    %253 = math.tanh %252 : vector<2x128xf32>
    %254 = arith.mulf %253, %19 : vector<2x128xf32>
    %255 = arith.addf %254, %24 : vector<2x128xf32>
    %256 = vector.extract_strided_slice %255 {offsets = [0, 0], sizes = [2, 32], strides = [1, 1]} : vector<2x128xf32> to vector<2x32xf32>
    %257 = vector.extract_strided_slice %255 {offsets = [0, 32], sizes = [2, 32], strides = [1, 1]} : vector<2x128xf32> to vector<2x32xf32>
    %258 = vector.extract_strided_slice %255 {offsets = [0, 64], sizes = [2, 32], strides = [1, 1]} : vector<2x128xf32> to vector<2x32xf32>
    %259 = vector.extract_strided_slice %255 {offsets = [0, 96], sizes = [2, 32], strides = [1, 1]} : vector<2x128xf32> to vector<2x32xf32>
    %260 = arith.mulf %257, %246 : vector<2x32xf32>
    %261 = arith.mulf %256, %258 : vector<2x32xf32>
    %262 = arith.addf %260, %261 : vector<2x32xf32>
    %263 = math.tanh %262 : vector<2x32xf32>
    %264 = arith.mulf %259, %263 : vector<2x32xf32>
    %c26 = arith.constant 26 : index
    %c0_42 = arith.constant 0 : index
    %265 = vector.load %arg3[%c26, %c0_42] : memref<30x32xf32, #tpu.memory_space<vmem>>, vector<2x32xf32>
    tpu.vector_store %arg3[%c26, %c0_42], %264 {strides = array<i32>} : memref<30x32xf32, #tpu.memory_space<vmem>>, vector<2x32xf32>,
    %266 = vector.extract_strided_slice %8 {offsets = [30, 0], sizes = [2, 128], strides = [1, 1]} : vector<32x128xf32> to vector<2x128xf32>
    %cst_43 = arith.constant dense<0.000000e+00> : vector<2x128xf32>
    %267 = tpu.matmul %264, %0, %cst_43 {dimension_numbers = #tpu.dot_dimension_numbers<[1], [0], [0], [1], [0, 0, 1, 1], [], []>} : vector<2x32xf32>, vector<32x128xf32>, vector<2x128xf32> -> vector<2x128xf32>
    %268 = arith.addf %266, %267 : vector<2x128xf32>
    %269 = math.tanh %268 : vector<2x128xf32>
    %270 = arith.mulf %269, %19 : vector<2x128xf32>
    %271 = arith.addf %270, %24 : vector<2x128xf32>
    %272 = vector.extract_strided_slice %271 {offsets = [0, 0], sizes = [2, 32], strides = [1, 1]} : vector<2x128xf32> to vector<2x32xf32>
    %273 = vector.extract_strided_slice %271 {offsets = [0, 32], sizes = [2, 32], strides = [1, 1]} : vector<2x128xf32> to vector<2x32xf32>
    %274 = vector.extract_strided_slice %271 {offsets = [0, 64], sizes = [2, 32], strides = [1, 1]} : vector<2x128xf32> to vector<2x32xf32>
    %275 = vector.extract_strided_slice %271 {offsets = [0, 96], sizes = [2, 32], strides = [1, 1]} : vector<2x128xf32> to vector<2x32xf32>
    %276 = arith.mulf %273, %262 : vector<2x32xf32>
    %277 = arith.mulf %272, %274 : vector<2x32xf32>
    %278 = arith.addf %276, %277 : vector<2x32xf32>
    %279 = math.tanh %278 : vector<2x32xf32>
    %280 = arith.mulf %275, %279 : vector<2x32xf32>
    %c28 = arith.constant 28 : index
    %c0_44 = arith.constant 0 : index
    %281 = vector.load %arg3[%c28, %c0_44] : memref<30x32xf32, #tpu.memory_space<vmem>>, vector<2x32xf32>
    tpu.vector_store %arg3[%c28, %c0_44], %280 {strides = array<i32>} : memref<30x32xf32, #tpu.memory_space<vmem>>, vector<2x32xf32>,
    %c0_45 = arith.constant 0 : index
    %c0_46 = arith.constant 0 : index
    %282 = vector.load %arg3[%c0_45, %c0_46] : memref<30x32xf32, #tpu.memory_space<vmem>>, vector<30x32xf32>
    %cst_47 = arith.constant dense<0.000000e+00> : vector<30x128xf32>
    %283 = tpu.matmul %282, %1, %cst_47 {dimension_numbers = #tpu.dot_dimension_numbers<[1], [0], [0], [1], [0, 0, 1, 1], [], []>} : vector<30x32xf32>, vector<32x128xf32>, vector<30x128xf32> -> vector<30x128xf32>
    %284 = vector.broadcast %4 : vector<1x128xf32> to vector<30x128xf32>
    %285 = arith.addf %283, %284 : vector<30x128xf32>
    %c0_48 = arith.constant 0 : index
    %c0_49 = arith.constant 0 : index
    %286 = vector.load %arg2[%c0_48, %c0_49] : memref<30x128xf32, #tpu.memory_space<vmem>>, vector<30x128xf32>
    tpu.vector_store %arg2[%c0_48, %c0_49], %285 {strides = array<i32>} : memref<30x128xf32, #tpu.memory_space<vmem>>, vector<30x128xf32>,
    return
  }
}

</mosaic_0001>

<llo_original>
// kernel: rnn_forward.1
$region0: #{rnn_forward.1}
  #allocation0 [shape = 'u32[]', space=smem, size = 0x4, offset = 0x4, fixed_abs, tag = 'smem constant byte address 0x4 - core index']
  #allocation1 [shape = 'u32[144,128]{1,0:T(1,128)}', space=vmem, size = 0x12000, scoped, tag = 'internal scratch']
  #allocation2 [shape = 'f32[30,32]{1,0:T(8,128)}', space=vmem, size = 0x4000, scoped, tag = 'scratch operand']
  %s0 = inlined_call_operand.vmem [shape: f32[32,3], index: 0, kind: input, shape index: {}]
  %s1 = inlined_call_operand.hbm [shape: f32[72,128], index: 1, kind: input, shape index: {}]
  %s2 = inlined_call_operand.vmem [shape: f32[30,128], index: 2, kind: output, shape index: {}]
  %s3 = sld [smem:[#allocation0]]
  $region22: #{rnn_forward.1} parent=0
    _
  %s5 = ssub.s32 1, %s3
  %s6 = scalar_select 0, %s5, %s3
  $region1: #{rnn_forward.1} parent=0
    #allocation3 [shape = 'u8[36864]{0}', space=vmem, size = 0x9000, scoped, tag = 'input window, operand 1, single buffered']
    #allocation4 [shape = 's32[1]{0}', space=sflag, size = 0x4, scoped, tag = 'scoped memory for rnn_forward.1']
    %7 = vsyncpa [#allocation4], 0
    // Predicated region
    $region2: #{rnn_forward.1} parent=1 // pred_check
      _
    $region3: #{rnn_forward.1} parent=1 // pred_check_branch
      %9 = sbr.rel (0) target = $region5
    $region4: #{rnn_forward.1} parent=1 // pred_region
      _
    $region5: #{rnn_forward.1} parent=1 // pred_fallthru
      _
    // Predicated region
    $region6: #{rnn_forward.1} parent=1 // pred_check
      _
    $region7: #{rnn_forward.1} parent=1 // pred_check_branch
      %11 = sbr.rel (0) target = $region9
    $region8: #{rnn_forward.1} parent=1 // pred_region
      %s13 = ssub.s32 1152, 1152
      %14 = vsyncadd [#allocation4], %s13
      %s15 = sshll.u32 [#allocation3], 4
      %s16 = int_to_ptr.vmem [resolvable:$true] %s15
      %21 = dma.hbm_to_vmem [thread:$0]  %s1, 1152, %s16, [#allocation4], 128, 128, 8
    $region9: #{rnn_forward.1} parent=1 // pred_fallthru
      _
    // Predicated region
    $region10: #{rnn_forward.1} parent=1 // pred_check
      _
    $region11: #{rnn_forward.1} parent=1 // pred_check_branch
      %23 = sbr.rel (0) target = $region13
    $region12: #{rnn_forward.1} parent=1 // pred_region
      %24 = dma.done [#allocation4], 1152
    $region13: #{rnn_forward.1} parent=1 // pred_fallthru
      _
    %v25 = vld [vmem:[#allocation3] sm:$0xff]
    %v26 = vld [vmem:[#allocation3 + $0x8] sm:$0xff]
    %v27 = vld [vmem:[#allocation3 + $0x10] sm:$0xff]
    %v28 = vld [vmem:[#allocation3 + $0x18] sm:$0xff]
    %v29 = vld [vmem:[#allocation3 + $0x20] sm:$0xff]
    %v30 = vld [vmem:[#allocation3 + $0x28] sm:$0xff]
    %v31 = vld [vmem:[#allocation3 + $0x30] sm:$0xff]
    %v32 = vld [vmem:[#allocation3 + $0x38] sm:$0xff]
    %v33 = vld [vmem:[#allocation3 + $0x40] sm:$0x7]
    %v34 = vld [vmem:[#allocation3 + $0x43] sm:$0x1]
    %v35 = vld [vmem:[#allocation3 + $0x44] sm:$0x1]
    %v36 = vld [vmem:[%s0] sm:$0xff]
    %v37 = vld [vmem:[%s0 + $0x8] sm:$0xff]
    %v38 = vld [vmem:[%s0 + $0x10] sm:$0xff]
    %v39 = vld [vmem:[%s0 + $0x18] sm:$0xff]
    %v40 = vlaneseq
    %v41 = vshrl.u32 %v40, 7
    %v42 = vsub.s32 0, %v41
    %v43 = vrot.slane %v34, %v42
    %vm44 = vcmask 23552
    %v46 = vsel %vm44, %v36, 0
    %v49 = vsel %vm44, %v37, 0
    %v52 = vsel %vm44, %v38, 0
    %v55 = vsel %vm44, %v39, 0
    %vm57 = vcmask 1042432
    %v59 = vsel %vm57, %v33, 0
    %61 = vmatprep.subr.mxu0 0.0
    %62 = vmatpush1.msra.mxu0 %v59
    %63 = vmatprep.subr.mxu0 0.0
    %64 = vmatpush1.msra.mxu0 0.0
    %65 = vmatprep.subr.mxu0 0.0
    %66 = vmatpush1.msra.mxu0 0.0
    %67 = vmatprep.subr.mxu0 0.0
    %68 = vmatpush1.msra.mxu0 0.0
    %69 = vmatprep.subr.mxu0 0.0
    %70 = vmatpush1.msra.mxu0 0.0
    %71 = vmatprep.subr.mxu0 0.0
    %72 = vmatpush1.msra.mxu0 0.0
    %73 = vmatprep.subr.mxu0 0.0
    %74 = vmatpush1.msra.mxu0 0.0
    %75 = vmatprep.subr.mxu0 0.0
    %76 = vmatpush1.msra.mxu0 0.0
    %77 = vmatprep.subr.mxu0 0.0
    %78 = vmatpush1.msra.mxu0 0.0
    %79 = vmatprep.subr.mxu0 0.0
    %80 = vmatpush1.msra.mxu0 0.0
    %81 = vmatprep.subr.mxu0 0.0
    %82 = vmatpush1.msra.mxu0 0.0
    %83 = vmatprep.subr.mxu0 0.0
    %84 = vmatpush1.msra.mxu0 0.0
    %85 = vmatprep.subr.mxu0 0.0
    %86 = vmatpush1.msra.mxu0 0.0
    %87 = vmatprep.subr.mxu0 0.0
    %88 = vmatpush1.msra.mxu0 0.0
    %89 = vmatprep.subr.mxu0 0.0
    %90 = vmatpush1.msra.mxu0 0.0
    %91 = vmatprep.subr.mxu0 0.0
    %92 = vmatpush1.msra.mxu0 0.0
    %93 = vmatprep.subr.mxu0 0.0
    %94 = vmatpush1.msra.mxu0 0.0
    %95 = vmatprep.subr.mxu0 0.0
    %96 = vmatpush1.msra.mxu0 0.0
    %97 = vmatprep.subr.mxu0 0.0
    %98 = vmatpush1.msra.mxu0 0.0
    %99 = vmatprep.subr.mxu0 0.0
    %100 = vmatpush1.msra.mxu0 0.0
    %101 = vmatprep.subr.mxu0 0.0
    %102 = vmatpush1.msra.mxu0 0.0
    %103 = vmatprep.subr.mxu0 0.0
    %104 = vmatpush1.msra.mxu0 0.0
    %105 = vmatprep.subr.mxu0 0.0
    %106 = vmatpush1.msra.mxu0 0.0
    %107 = vmatprep.subr.mxu0 0.0
    %108 = vmatpush1.msra.mxu0 0.0
    %109 = vmatprep.subr.mxu0 0.0
    %110 = vmatpush1.msra.mxu0 0.0
    %111 = vmatprep.subr.mxu0 0.0
    %112 = vmatpush1.msra.mxu0 0.0
    %113 = vmatprep.subr.mxu0 0.0
    %114 = vmatpush1.msra.mxu0 0.0
    %115 = vmatprep.subr.mxu0 0.0
    %116 = vmatpush1.msra.mxu0 0.0
    %117 = vmatprep.subr.mxu0 0.0
    %118 = vmatpush1.msra.mxu0 0.0
    %119 = vmatprep.subr.mxu0 0.0
    %120 = vmatpush1.msra.mxu0 0.0
    %121 = vmatprep.subr.mxu0 0.0
    %122 = vmatpush1.msra.mxu0 0.0
    %123 = vmatprep.subr.mxu0 0.0
    %124 = vmatpush1.msra.mxu0 0.0
    %125 = vmatprep.mubr.f32.mxu0 0.0
    %126 = vmatmul.mubr.f32.gmra.mrb[0].mxu0 %v46
    %v127 = vpop.f32.mrb[0].mxu0
    %v128 = vadd.f32 %v43, %v127
    %v129 = vpop.f32.mrb[0].mxu0
    %130 = vmatprep.mubr.f32.mxu0 0.0
    %131 = vmatmul.mubr.f32.gmra.mrb[0].mxu0 %v49
    %v132 = vpop.f32.mrb[0].mxu0
    %v133 = vadd.f32 %v43, %v132
    %v134 = vpop.f32.mrb[0].mxu0
    %135 = vmatprep.mubr.f32.mxu0 0.0
    %136 = vmatmul.mubr.f32.gmra.mrb[0].mxu0 %v52
    %v137 = vpop.f32.mrb[0].mxu0
    %v138 = vadd.f32 %v43, %v137
    %v139 = vpop.f32.mrb[0].mxu0
    %140 = vmatprep.mubr.f32.mxu0 0.0
    %141 = vmatmul.mubr.f32.gmra.mrb[0].mxu0 %v55
    %v142 = vpop.f32.mrb[0].mxu0
    %v143 = vadd.f32 %v43, %v142
    %v144 = vpop.f32.mrb[0].mxu0
    %145 = vdwg.mxu0
    %v146 = vlaneseq
    %v147 = vand.u32 %v146, 127
    %vm148 = vcmp.ge.s32.totalorder %v147, 64
    %vm149 = vcmp.lt.s32.totalorder %v147, 96
    %vm150 = vmand %vm148, %vm149
    %v151 = vsel %vm150, 1.0, 0.5
    %v152 = vsel %vm150, 0.0, 0.5
    %vm153 = vcmask 261120
    %v155 = vsel %vm153, 0.0, 0
    %157 = vmatprep.subr.mxu0 0.0
    %158 = vmatpush1.msra.mxu0 %v25
    %159 = vmatprep.subr.mxu0 0.0
    %160 = vmatpush1.msra.mxu0 %v26
    %161 = vmatprep.subr.mxu0 0.0
    %162 = vmatpush1.msra.mxu0 %v27
    %163 = vmatprep.subr.mxu0 0.0
    %164 = vmatpush1.msra.mxu0 %v28
    %165 = vmatprep.subr.mxu0 0.0
    %166 = vmatpush1.msra.mxu0 0.0
    %167 = vmatprep.subr.mxu0 0.0
    %168 = vmatpush1.msra.mxu0 0.0
    %169 = vmatprep.subr.mxu0 0.0
    %170 = vmatpush1.msra.mxu0 0.0
    %171 = vmatprep.subr.mxu0 0.0
    %172 = vmatpush1.msra.mxu0 0.0
    %173 = vmatprep.subr.mxu0 0.0
    %174 = vmatpush1.msra.mxu0 0.0
    %175 = vmatprep.subr.mxu0 0.0
    %176 = vmatpush1.msra.mxu0 0.0
    %177 = vmatprep.subr.mxu0 0.0
    %178 = vmatpush1.msra.mxu0 0.0
    %179 = vmatprep.subr.mxu0 0.0
    %180 = vmatpush1.msra.mxu0 0.0
    %181 = vmatprep.subr.mxu0 0.0
    %182 = vmatpush1.msra.mxu0 0.0
    %183 = vmatprep.subr.mxu0 0.0
    %184 = vmatpush1.msra.mxu0 0.0
    %185 = vmatprep.subr.mxu0 0.0
    %186 = vmatpush1.msra.mxu0 0.0
    %187 = vmatprep.subr.mxu0 0.0
    %188 = vmatpush1.msra.mxu0 0.0
    %189 = vmatprep.subr.mxu0 0.0
    %190 = vmatpush1.msra.mxu0 0.0
    %191 = vmatprep.subr.mxu0 0.0
    %192 = vmatpush1.msra.mxu0 0.0
    %193 = vmatprep.subr.mxu0 0.0
    %194 = vmatpush1.msra.mxu0 0.0
    %195 = vmatprep.subr.mxu0 0.0
    %196 = vmatpush1.msra.mxu0 0.0
    %197 = vmatprep.subr.mxu0 0.0
    %198 = vmatpush1.msra.mxu0 0.0
    %199 = vmatprep.subr.mxu0 0.0
    %200 = vmatpush1.msra.mxu0 0.0
    %201 = vmatprep.subr.mxu0 0.0
    %202 = vmatpush1.msra.mxu0 0.0
    %203 = vmatprep.subr.mxu0 0.0
    %204 = vmatpush1.msra.mxu0 0.0
    %205 = vmatprep.subr.mxu0 0.0
    %206 = vmatpush1.msra.mxu0 0.0
    %207 = vmatprep.subr.mxu0 0.0
    %208 = vmatpush1.msra.mxu0 0.0
    %209 = vmatprep.subr.mxu0 0.0
    %210 = vmatpush1.msra.mxu0 0.0
    %211 = vmatprep.subr.mxu0 0.0
    %212 = vmatpush1.msra.mxu0 0.0
    %213 = vmatprep.subr.mxu0 0.0
    %214 = vmatpush1.msra.mxu0 0.0
    %215 = vmatprep.subr.mxu0 0.0
    %216 = vmatpush1.msra.mxu0 0.0
    %217 = vmatprep.subr.mxu0 0.0
    %218 = vmatpush1.msra.mxu0 0.0
    %219 = vmatprep.subr.mxu0 0.0
    %220 = vmatpush1.msra.mxu0 0.0
    %221 = vmatprep.mubr.f32.mxu0 0.0
    %222 = vmatmul.mubr.f32.gmra.mrb[0].mxu0 %v155
    %v223 = vpop.f32.mrb[0].mxu0
    %v224 = vadd.f32 0.0, %v223
    %v225 = vpop.f32.mrb[0].mxu0
    %226 = vdwg.mxu0
    %v227 = vadd.f32 %v128, %v224
    %v228 = vtanh.pop %v227
    %v229 = vmul.f32 %v228, %v151
    %v230 = vadd.f32 %v229, %v152
    %v231 = vmul.f32 %v230, 0.0
    %233 = vrot.lane.b32.xlu0 %v230, 64
    %v234 = vpop.permute.xlu0 %233
    %v236 = vmul.f32 %v230, %v234
    %238 = vrot.lane.b32.xlu0 %v236, 32
    %v239 = vpop.permute.xlu0 %238
    %v241 = vadd.f32 %v231, %v239
    %v242 = vtanh.pop %v241
    %244 = vrot.lane.b32.xlu0 %v242, 64
    %v245 = vpop.permute.xlu0 %244
    %v247 = vmul.f32 %v230, %v245
    %249 = vrot.lane.b32.xlu0 %v247, 32
    %v250 = vpop.permute.xlu0 %249
    %v251 = vsel %vm153, %v250, 0
    %253 = vmatprep.subr.mxu0 0.0
    %254 = vmatpush1.msra.mxu0 %v25
    %255 = vmatprep.subr.mxu0 0.0
    %256 = vmatpush1.msra.mxu0 %v26
    %257 = vmatprep.subr.mxu0 0.0
    %258 = vmatpush1.msra.mxu0 %v27
    %259 = vmatprep.subr.mxu0 0.0
    %260 = vmatpush1.msra.mxu0 %v28
    %261 = vmatprep.subr.mxu0 0.0
    %262 = vmatpush1.msra.mxu0 0.0
    %263 = vmatprep.subr.mxu0 0.0
    %264 = vmatpush1.msra.mxu0 0.0
    %265 = vmatprep.subr.mxu0 0.0
    %266 = vmatpush1.msra.mxu0 0.0
    %267 = vmatprep.subr.mxu0 0.0
    %268 = vmatpush1.msra.mxu0 0.0
    %269 = vmatprep.subr.mxu0 0.0
    %270 = vmatpush1.msra.mxu0 0.0
    %271 = vmatprep.subr.mxu0 0.0
    %272 = vmatpush1.msra.mxu0 0.0
    %273 = vmatprep.subr.mxu0 0.0
    %274 = vmatpush1.msra.mxu0 0.0
    %275 = vmatprep.subr.mxu0 0.0
    %276 = vmatpush1.msra.mxu0 0.0
    %277 = vmatprep.subr.mxu0 0.0
    %278 = vmatpush1.msra.mxu0 0.0
    %279 = vmatprep.subr.mxu0 0.0
    %280 = vmatpush1.msra.mxu0 0.0
    %281 = vmatprep.subr.mxu0 0.0
    %282 = vmatpush1.msra.mxu0 0.0
    %283 = vmatprep.subr.mxu0 0.0
    %284 = vmatpush1.msra.mxu0 0.0
    %285 = vmatprep.subr.mxu0 0.0
    %286 = vmatpush1.msra.mxu0 0.0
    %287 = vmatprep.subr.mxu0 0.0
    %288 = vmatpush1.msra.mxu0 0.0
    %289 = vmatprep.subr.mxu0 0.0
    %290 = vmatpush1.msra.mxu0 0.0
    %291 = vmatprep.subr.mxu0 0.0
    %292 = vmatpush1.msra.mxu0 0.0
    %293 = vmatprep.subr.mxu0 0.0
    %294 = vmatpush1.msra.mxu0 0.0
    %295 = vmatprep.subr.mxu0 0.0
    %296 = vmatpush1.msra.mxu0 0.0
    %297 = vmatprep.subr.mxu0 0.0
    %298 = vmatpush1.msra.mxu0 0.0
    %299 = vmatprep.subr.mxu0 0.0
    %300 = vmatpush1.msra.mxu0 0.0
    %301 = vmatprep.subr.mxu0 0.0
    %302 = vmatpush1.msra.mxu0 0.0
    %303 = vmatprep.subr.mxu0 0.0
    %304 = vmatpush1.msra.mxu0 0.0
    %305 = vmatprep.subr.mxu0 0.0
    %306 = vmatpush1.msra.mxu0 0.0
    %307 = vmatprep.subr.mxu0 0.0
    %308 = vmatpush1.msra.mxu0 0.0
    %309 = vmatprep.subr.mxu0 0.0
    %310 = vmatpush1.msra.mxu0 0.0
    %311 = vmatprep.subr.mxu0 0.0
    %312 = vmatpush1.msra.mxu0 0.0
    %313 = vmatprep.subr.mxu0 0.0
    %314 = vmatpush1.msra.mxu0 0.0
    %315 = vmatprep.subr.mxu0 0.0
    %316 = vmatpush1.msra.mxu0 0.0
    %317 = vmatprep.mubr.f32.mxu0 0.0
    %318 = vmatmul.mubr.f32.gmra.mrb[0].mxu0 %v251
    %v319 = vpop.f32.mrb[0].mxu0
    %v320 = vadd.f32 0.0, %v319
    %v321 = vpop.f32.mrb[0].mxu0
    %322 = vdwg.mxu0
    %v324 = vrot.slane %v320, 6
    %v326 = vadd.f32 %v128, %v324
    %v327 = vtanh.pop %v326
    %v328 = vmul.f32 %v327, %v151
    %v329 = vadd.f32 %v328, %v152
    %v331 = vrot.slane %v241, 6
    %v333 = vmul.f32 %v329, %v331
    %335 = vrot.lane.b32.xlu0 %v329, 64
    %v336 = vpop.permute.xlu0 %335
    %v338 = vmul.f32 %v329, %v336
    %340 = vrot.lane.b32.xlu0 %v338, 32
    %v341 = vpop.permute.xlu0 %340
    %v343 = vadd.f32 %v333, %v341
    %v344 = vtanh.pop %v343
    %346 = vrot.lane.b32.xlu0 %v344, 64
    %v347 = vpop.permute.xlu0 %346
    %v349 = vmul.f32 %v329, %v347
    %351 = vrot.lane.b32.xlu0 %v349, 32
    %v352 = vpop.permute.xlu0 %351
    %vm354 = vcmask 257026
    %355 = vst.msk [vmem:[#allocation2 - $0x2] sm:$0xc] %vm354, %v352
    %v356 = vrot.slane %v349, 2
    %357 = vrot.lane.b32.xlu0 %v356, 32
    %v358 = vpop.permute.xlu0 %357
    %v359 = vsel %vm153, %v358, 0
    %361 = vmatprep.subr.mxu0 0.0
    %362 = vmatpush1.msra.mxu0 %v25
    %363 = vmatprep.subr.mxu0 0.0
    %364 = vmatpush1.msra.mxu0 %v26
    %365 = vmatprep.subr.mxu0 0.0
    %366 = vmatpush1.msra.mxu0 %v27
    %367 = vmatprep.subr.mxu0 0.0
    %368 = vmatpush1.msra.mxu0 %v28
    %369 = vmatprep.subr.mxu0 0.0
    %370 = vmatpush1.msra.mxu0 0.0
    %371 = vmatprep.subr.mxu0 0.0
    %372 = vmatpush1.msra.mxu0 0.0
    %373 = vmatprep.subr.mxu0 0.0
    %374 = vmatpush1.msra.mxu0 0.0
    %375 = vmatprep.subr.mxu0 0.0
    %376 = vmatpush1.msra.mxu0 0.0
    %377 = vmatprep.subr.mxu0 0.0
    %378 = vmatpush1.msra.mxu0 0.0
    %379 = vmatprep.subr.mxu0 0.0
    %380 = vmatpush1.msra.mxu0 0.0
    %381 = vmatprep.subr.mxu0 0.0
    %382 = vmatpush1.msra.mxu0 0.0
    %383 = vmatprep.subr.mxu0 0.0
    %384 = vmatpush1.msra.mxu0 0.0
    %385 = vmatprep.subr.mxu0 0.0
    %386 = vmatpush1.msra.mxu0 0.0
    %387 = vmatprep.subr.mxu0 0.0
    %388 = vmatpush1.msra.mxu0 0.0
    %389 = vmatprep.subr.mxu0 0.0
    %390 = vmatpush1.msra.mxu0 0.0
    %391 = vmatprep.subr.mxu0 0.0
    %392 = vmatpush1.msra.mxu0 0.0
    %393 = vmatprep.subr.mxu0 0.0
    %394 = vmatpush1.msra.mxu0 0.0
    %395 = vmatprep.subr.mxu0 0.0
    %396 = vmatpush1.msra.mxu0 0.0
    %397 = vmatprep.subr.mxu0 0.0
    %398 = vmatpush1.msra.mxu0 0.0
    %399 = vmatprep.subr.mxu0 0.0
    %400 = vmatpush1.msra.mxu0 0.0
    %401 = vmatprep.subr.mxu0 0.0
    %402 = vmatpush1.msra.mxu0 0.0
    %403 = vmatprep.subr.mxu0 0.0
    %404 = vmatpush1.msra.mxu0 0.0
    %405 = vmatprep.subr.mxu0 0.0
    %406 = vmatpush1.msra.mxu0 0.0
    %407 = vmatprep.subr.mxu0 0.0
    %408 = vmatpush1.msra.mxu0 0.0
    %409 = vmatprep.subr.mxu0 0.0
    %410 = vmatpush1.msra.mxu0 0.0
    %411 = vmatprep.subr.mxu0 0.0
    %412 = vmatpush1.msra.mxu0 0.0
    %413 = vmatprep.subr.mxu0 0.0
    %414 = vmatpush1.msra.mxu0 0.0
    %415 = vmatprep.subr.mxu0 0.0
    %416 = vmatpush1.msra.mxu0 0.0
    %417 = vmatprep.subr.mxu0 0.0
    %418 = vmatpush1.msra.mxu0 0.0
    %419 = vmatprep.subr.mxu0 0.0
    %420 = vmatpush1.msra.mxu0 0.0
    %421 = vmatprep.subr.mxu0 0.0
    %422 = vmatpush1.msra.mxu0 0.0
    %423 = vmatprep.subr.mxu0 0.0
    %424 = vmatpush1.msra.mxu0 0.0
    %425 = vmatprep.mubr.f32.mxu0 0.0
    %426 = vmatmul.mubr.f32.gmra.mrb[0].mxu0 %v359
    %v427 = vpop.f32.mrb[0].mxu0
    %v428 = vadd.f32 0.0, %v427
    %v429 = vpop.f32.mrb[0].mxu0
    %430 = vdwg.mxu0
    %v432 = vrot.slane %v428, 4
    %v434 = vadd.f32 %v128, %v432
    %v435 = vtanh.pop %v434
    %v436 = vmul.f32 %v435, %v151
    %v437 = vadd.f32 %v436, %v152
    %v439 = vrot.slane %v343, 6
    %v441 = vmul.f32 %v437, %v439
    %443 = vrot.lane.b32.xlu0 %v437, 64
    %v444 = vpop.permute.xlu0 %443
    %v446 = vmul.f32 %v437, %v444
    %448 = vrot.lane.b32.xlu0 %v446, 32
    %v449 = vpop.permute.xlu0 %448
    %v451 = vadd.f32 %v441, %v449
    %v452 = vtanh.pop %v451
    %454 = vrot.lane.b32.xlu0 %v452, 64
    %v455 = vpop.permute.xlu0 %454
    %v457 = vmul.f32 %v437, %v455
    %459 = vrot.lane.b32.xlu0 %v457, 32
    %v460 = vpop.permute.xlu0 %459
    %vm462 = vcmask 259076
    %463 = vst.msk [vmem:[#allocation2 - $0x2] sm:$0x30] %vm462, %v460
    %v464 = vrot.slane %v457, 4
    %465 = vrot.lane.b32.xlu0 %v464, 32
    %v466 = vpop.permute.xlu0 %465
    %v467 = vsel %vm153, %v466, 0
    %469 = vmatprep.subr.mxu0 0.0
    %470 = vmatpush1.msra.mxu0 %v25
    %471 = vmatprep.subr.mxu0 0.0
    %472 = vmatpush1.msra.mxu0 %v26
    %473 = vmatprep.subr.mxu0 0.0
    %474 = vmatpush1.msra.mxu0 %v27
    %475 = vmatprep.subr.mxu0 0.0
    %476 = vmatpush1.msra.mxu0 %v28
    %477 = vmatprep.subr.mxu0 0.0
    %478 = vmatpush1.msra.mxu0 0.0
    %479 = vmatprep.subr.mxu0 0.0
    %480 = vmatpush1.msra.mxu0 0.0
    %481 = vmatprep.subr.mxu0 0.0
    %482 = vmatpush1.msra.mxu0 0.0
    %483 = vmatprep.subr.mxu0 0.0
    %484 = vmatpush1.msra.mxu0 0.0
    %485 = vmatprep.subr.mxu0 0.0
    %486 = vmatpush1.msra.mxu0 0.0
    %487 = vmatprep.subr.mxu0 0.0
    %488 = vmatpush1.msra.mxu0 0.0
    %489 = vmatprep.subr.mxu0 0.0
    %490 = vmatpush1.msra.mxu0 0.0
    %491 = vmatprep.subr.mxu0 0.0
    %492 = vmatpush1.msra.mxu0 0.0
    %493 = vmatprep.subr.mxu0 0.0
    %494 = vmatpush1.msra.mxu0 0.0
    %495 = vmatprep.subr.mxu0 0.0
    %496 = vmatpush1.msra.mxu0 0.0
    %497 = vmatprep.subr.mxu0 0.0
    %498 = vmatpush1.msra.mxu0 0.0
    %499 = vmatprep.subr.mxu0 0.0
    %500 = vmatpush1.msra.mxu0 0.0
    %501 = vmatprep.subr.mxu0 0.0
    %502 = vmatpush1.msra.mxu0 0.0
    %503 = vmatprep.subr.mxu0 0.0
    %504 = vmatpush1.msra.mxu0 0.0
    %505 = vmatprep.subr.mxu0 0.0
    %506 = vmatpush1.msra.mxu0 0.0
    %507 = vmatprep.subr.mxu0 0.0
    %508 = vmatpush1.msra.mxu0 0.0
    %509 = vmatprep.subr.mxu0 0.0
    %510 = vmatpush1.msra.mxu0 0.0
    %511 = vmatprep.subr.mxu0 0.0
    %512 = vmatpush1.msra.mxu0 0.0
    %513 = vmatprep.subr.mxu0 0.0
    %514 = vmatpush1.msra.mxu0 0.0
    %515 = vmatprep.subr.mxu0 0.0
    %516 = vmatpush1.msra.mxu0 0.0
    %517 = vmatprep.subr.mxu0 0.0
    %518 = vmatpush1.msra.mxu0 0.0
    %519 = vmatprep.subr.mxu0 0.0
    %520 = vmatpush1.msra.mxu0 0.0
    %521 = vmatprep.subr.mxu0 0.0
    %522 = vmatpush1.msra.mxu0 0.0
    %523 = vmatprep.subr.mxu0 0.0
    %524 = vmatpush1.msra.mxu0 0.0
    %525 = vmatprep.subr.mxu0 0.0
    %526 = vmatpush1.msra.mxu0 0.0
    %527 = vmatprep.subr.mxu0 0.0
    %528 = vmatpush1.msra.mxu0 0.0
    %529 = vmatprep.subr.mxu0 0.0
    %530 = vmatpush1.msra.mxu0 0.0
    %531 = vmatprep.subr.mxu0 0.0
    %532 = vmatpush1.msra.mxu0 0.0
    %533 = vmatprep.mubr.f32.mxu0 0.0
    %534 = vmatmul.mubr.f32.gmra.mrb[0].mxu0 %v467
    %v535 = vpop.f32.mrb[0].mxu0
    %v536 = vadd.f32 0.0, %v535
    %v537 = vpop.f32.mrb[0].mxu0
    %538 = vdwg.mxu0
    %v540 = vrot.slane %v536, 2
    %v542 = vadd.f32 %v128, %v540
    %v543 = vtanh.pop %v542
    %v544 = vmul.f32 %v543, %v151
    %v545 = vadd.f32 %v544, %v152
    %v547 = vrot.slane %v451, 6
    %v549 = vmul.f32 %v545, %v547
    %551 = vrot.lane.b32.xlu0 %v545, 64
    %v552 = vpop.permute.xlu0 %551
    %v554 = vmul.f32 %v545, %v552
    %556 = vrot.lane.b32.xlu0 %v554, 32
    %v557 = vpop.permute.xlu0 %556
    %v559 = vadd.f32 %v549, %v557
    %v560 = vtanh.pop %v559
    %562 = vrot.lane.b32.xlu0 %v560, 64
    %v563 = vpop.permute.xlu0 %562
    %v565 = vmul.f32 %v545, %v563
    %567 = vrot.lane.b32.xlu0 %v565, 32
    %v568 = vpop.permute.xlu0 %567
    %vm570 = vcmask 261126
    %571 = vst.msk [vmem:[#allocation2 - $0x2] sm:$0xc0] %vm570, %v568
    %v572 = vrot.slane %v565, 6
    %573 = vrot.lane.b32.xlu0 %v572, 32
    %v574 = vpop.permute.xlu0 %573
    %v575 = vsel %vm153, %v574, 0
    %577 = vmatprep.subr.mxu0 0.0
    %578 = vmatpush1.msra.mxu0 %v25
    %579 = vmatprep.subr.mxu0 0.0
    %580 = vmatpush1.msra.mxu0 %v26
    %581 = vmatprep.subr.mxu0 0.0
    %582 = vmatpush1.msra.mxu0 %v27
    %583 = vmatprep.subr.mxu0 0.0
    %584 = vmatpush1.msra.mxu0 %v28
    %585 = vmatprep.subr.mxu0 0.0
    %586 = vmatpush1.msra.mxu0 0.0
    %587 = vmatprep.subr.mxu0 0.0
    %588 = vmatpush1.msra.mxu0 0.0
    %589 = vmatprep.subr.mxu0 0.0
    %590 = vmatpush1.msra.mxu0 0.0
    %591 = vmatprep.subr.mxu0 0.0
    %592 = vmatpush1.msra.mxu0 0.0
    %593 = vmatprep.subr.mxu0 0.0
    %594 = vmatpush1.msra.mxu0 0.0
    %595 = vmatprep.subr.mxu0 0.0
    %596 = vmatpush1.msra.mxu0 0.0
    %597 = vmatprep.subr.mxu0 0.0
    %598 = vmatpush1.msra.mxu0 0.0
    %599 = vmatprep.subr.mxu0 0.0
    %600 = vmatpush1.msra.mxu0 0.0
    %601 = vmatprep.subr.mxu0 0.0
    %602 = vmatpush1.msra.mxu0 0.0
    %603 = vmatprep.subr.mxu0 0.0
    %604 = vmatpush1.msra.mxu0 0.0
    %605 = vmatprep.subr.mxu0 0.0
    %606 = vmatpush1.msra.mxu0 0.0
    %607 = vmatprep.subr.mxu0 0.0
    %608 = vmatpush1.msra.mxu0 0.0
    %609 = vmatprep.subr.mxu0 0.0
    %610 = vmatpush1.msra.mxu0 0.0
    %611 = vmatprep.subr.mxu0 0.0
    %612 = vmatpush1.msra.mxu0 0.0
    %613 = vmatprep.subr.mxu0 0.0
    %614 = vmatpush1.msra.mxu0 0.0
    %615 = vmatprep.subr.mxu0 0.0
    %616 = vmatpush1.msra.mxu0 0.0
    %617 = vmatprep.subr.mxu0 0.0
    %618 = vmatpush1.msra.mxu0 0.0
    %619 = vmatprep.subr.mxu0 0.0
    %620 = vmatpush1.msra.mxu0 0.0
    %621 = vmatprep.subr.mxu0 0.0
    %622 = vmatpush1.msra.mxu0 0.0
    %623 = vmatprep.subr.mxu0 0.0
    %624 = vmatpush1.msra.mxu0 0.0
    %625 = vmatprep.subr.mxu0 0.0
    %626 = vmatpush1.msra.mxu0 0.0
    %627 = vmatprep.subr.mxu0 0.0
    %628 = vmatpush1.msra.mxu0 0.0
    %629 = vmatprep.subr.mxu0 0.0
    %630 = vmatpush1.msra.mxu0 0.0
    %631 = vmatprep.subr.mxu0 0.0
    %632 = vmatpush1.msra.mxu0 0.0
    %633 = vmatprep.subr.mxu0 0.0
    %634 = vmatpush1.msra.mxu0 0.0
    %635 = vmatprep.subr.mxu0 0.0
    %636 = vmatpush1.msra.mxu0 0.0
    %637 = vmatprep.subr.mxu0 0.0
    %638 = vmatpush1.msra.mxu0 0.0
    %639 = vmatprep.subr.mxu0 0.0
    %640 = vmatpush1.msra.mxu0 0.0
    %641 = vmatprep.mubr.f32.mxu0 0.0
    %642 = vmatmul.mubr.f32.gmra.mrb[0].mxu0 %v575
    %v643 = vpop.f32.mrb[0].mxu0
    %v644 = vadd.f32 0.0, %v643
    %v645 = vpop.f32.mrb[0].mxu0
    %646 = vdwg.mxu0
    %v647 = vadd.f32 %v133, %v644
    %v648 = vtanh.pop %v647
    %v649 = vmul.f32 %v648, %v151
    %v650 = vadd.f32 %v649, %v152
    %v652 = vrot.slane %v559, 6
    %v654 = vmul.f32 %v650, %v652
    %656 = vrot.lane.b32.xlu0 %v650, 64
    %v657 = vpop.permute.xlu0 %656
    %v659 = vmul.f32 %v650, %v657
    %661 = vrot.lane.b32.xlu0 %v659, 32
    %v662 = vpop.permute.xlu0 %661
    %v664 = vadd.f32 %v654, %v662
    %v665 = vtanh.pop %v664
    %667 = vrot.lane.b32.xlu0 %v665, 64
    %v668 = vpop.permute.xlu0 %667
    %v670 = vmul.f32 %v650, %v668
    %672 = vrot.lane.b32.xlu0 %v670, 32
    %v673 = vpop.permute.xlu0 %672
    %vm675 = vcmask 254976
    %676 = vst.msk [vmem:[#allocation2 + $0x6] sm:$0x3] %vm675, %v673
    %v677 = vsel %vm153, %v673, 0
    %679 = vmatprep.subr.mxu0 0.0
    %680 = vmatpush1.msra.mxu0 %v25
    %681 = vmatprep.subr.mxu0 0.0
    %682 = vmatpush1.msra.mxu0 %v26
    %683 = vmatprep.subr.mxu0 0.0
    %684 = vmatpush1.msra.mxu0 %v27
    %685 = vmatprep.subr.mxu0 0.0
    %686 = vmatpush1.msra.mxu0 %v28
    %687 = vmatprep.subr.mxu0 0.0
    %688 = vmatpush1.msra.mxu0 0.0
    %689 = vmatprep.subr.mxu0 0.0
    %690 = vmatpush1.msra.mxu0 0.0
    %691 = vmatprep.subr.mxu0 0.0
    %692 = vmatpush1.msra.mxu0 0.0
    %693 = vmatprep.subr.mxu0 0.0
    %694 = vmatpush1.msra.mxu0 0.0
    %695 = vmatprep.subr.mxu0 0.0
    %696 = vmatpush1.msra.mxu0 0.0
    %697 = vmatprep.subr.mxu0 0.0
    %698 = vmatpush1.msra.mxu0 0.0
    %699 = vmatprep.subr.mxu0 0.0
    %700 = vmatpush1.msra.mxu0 0.0
    %701 = vmatprep.subr.mxu0 0.0
    %702 = vmatpush1.msra.mxu0 0.0
    %703 = vmatprep.subr.mxu0 0.0
    %704 = vmatpush1.msra.mxu0 0.0
    %705 = vmatprep.subr.mxu0 0.0
    %706 = vmatpush1.msra.mxu0 0.0
    %707 = vmatprep.subr.mxu0 0.0
    %708 = vmatpush1.msra.mxu0 0.0
    %709 = vmatprep.subr.mxu0 0.0
    %710 = vmatpush1.msra.mxu0 0.0
    %711 = vmatprep.subr.mxu0 0.0
    %712 = vmatpush1.msra.mxu0 0.0
    %713 = vmatprep.subr.mxu0 0.0
    %714 = vmatpush1.msra.mxu0 0.0
    %715 = vmatprep.subr.mxu0 0.0
    %716 = vmatpush1.msra.mxu0 0.0
    %717 = vmatprep.subr.mxu0 0.0
    %718 = vmatpush1.msra.mxu0 0.0
    %719 = vmatprep.subr.mxu0 0.0
    %720 = vmatpush1.msra.mxu0 0.0
    %721 = vmatprep.subr.mxu0 0.0
    %722 = vmatpush1.msra.mxu0 0.0
    %723 = vmatprep.subr.mxu0 0.0
    %724 = vmatpush1.msra.mxu0 0.0
    %725 = vmatprep.subr.mxu0 0.0
    %726 = vmatpush1.msra.mxu0 0.0
    %727 = vmatprep.subr.mxu0 0.0
    %728 = vmatpush1.msra.mxu0 0.0
    %729 = vmatprep.subr.mxu0 0.0
    %730 = vmatpush1.msra.mxu0 0.0
    %731 = vmatprep.subr.mxu0 0.0
    %732 = vmatpush1.msra.mxu0 0.0
    %733 = vmatprep.subr.mxu0 0.0
    %734 = vmatpush1.msra.mxu0 0.0
    %735 = vmatprep.subr.mxu0 0.0
    %736 = vmatpush1.msra.mxu0 0.0
    %737 = vmatprep.subr.mxu0 0.0
    %738 = vmatpush1.msra.mxu0 0.0
    %739 = vmatprep.subr.mxu0 0.0
    %740 = vmatpush1.msra.mxu0 0.0
    %741 = vmatprep.subr.mxu0 0.0
    %742 = vmatpush1.msra.mxu0 0.0
    %743 = vmatprep.mubr.f32.mxu0 0.0
    %744 = vmatmul.mubr.f32.gmra.mrb[0].mxu0 %v677
    %v745 = vpop.f32.mrb[0].mxu0
    %v746 = vadd.f32 0.0, %v745
    %v747 = vpop.f32.mrb[0].mxu0
    %748 = vdwg.mxu0
    %v750 = vrot.slane %v746, 6
    %v752 = vadd.f32 %v133, %v750
    %v753 = vtanh.pop %v752
    %v754 = vmul.f32 %v753, %v151
    %v755 = vadd.f32 %v754, %v152
    %v757 = vrot.slane %v664, 6
    %v759 = vmul.f32 %v755, %v757
    %761 = vrot.lane.b32.xlu0 %v755, 64
    %v762 = vpop.permute.xlu0 %761
    %v764 = vmul.f32 %v755, %v762
    %766 = vrot.lane.b32.xlu0 %v764, 32
    %v767 = vpop.permute.xlu0 %766
    %v769 = vadd.f32 %v759, %v767
    %v770 = vtanh.pop %v769
    %772 = vrot.lane.b32.xlu0 %v770, 64
    %v773 = vpop.permute.xlu0 %772
    %v775 = vmul.f32 %v755, %v773
    %777 = vrot.lane.b32.xlu0 %v775, 32
    %v778 = vpop.permute.xlu0 %777
    %780 = vst.msk [vmem:[#allocation2 + $0x6] sm:$0xc] %vm354, %v778
    %v781 = vrot.slane %v775, 2
    %782 = vrot.lane.b32.xlu0 %v781, 32
    %v783 = vpop.permute.xlu0 %782
    %v784 = vsel %vm153, %v783, 0
    %786 = vmatprep.subr.mxu0 0.0
    %787 = vmatpush1.msra.mxu0 %v25
    %788 = vmatprep.subr.mxu0 0.0
    %789 = vmatpush1.msra.mxu0 %v26
    %790 = vmatprep.subr.mxu0 0.0
    %791 = vmatpush1.msra.mxu0 %v27
    %792 = vmatprep.subr.mxu0 0.0
    %793 = vmatpush1.msra.mxu0 %v28
    %794 = vmatprep.subr.mxu0 0.0
    %795 = vmatpush1.msra.mxu0 0.0
    %796 = vmatprep.subr.mxu0 0.0
    %797 = vmatpush1.msra.mxu0 0.0
    %798 = vmatprep.subr.mxu0 0.0
    %799 = vmatpush1.msra.mxu0 0.0
    %800 = vmatprep.subr.mxu0 0.0
    %801 = vmatpush1.msra.mxu0 0.0
    %802 = vmatprep.subr.mxu0 0.0
    %803 = vmatpush1.msra.mxu0 0.0
    %804 = vmatprep.subr.mxu0 0.0
    %805 = vmatpush1.msra.mxu0 0.0
    %806 = vmatprep.subr.mxu0 0.0
    %807 = vmatpush1.msra.mxu0 0.0
    %808 = vmatprep.subr.mxu0 0.0
    %809 = vmatpush1.msra.mxu0 0.0
    %810 = vmatprep.subr.mxu0 0.0
    %811 = vmatpush1.msra.mxu0 0.0
    %812 = vmatprep.subr.mxu0 0.0
    %813 = vmatpush1.msra.mxu0 0.0
    %814 = vmatprep.subr.mxu0 0.0
    %815 = vmatpush1.msra.mxu0 0.0
    %816 = vmatprep.subr.mxu0 0.0
    %817 = vmatpush1.msra.mxu0 0.0
    %818 = vmatprep.subr.mxu0 0.0
    %819 = vmatpush1.msra.mxu0 0.0
    %820 = vmatprep.subr.mxu0 0.0
    %821 = vmatpush1.msra.mxu0 0.0
    %822 = vmatprep.subr.mxu0 0.0
    %823 = vmatpush1.msra.mxu0 0.0
    %824 = vmatprep.subr.mxu0 0.0
    %825 = vmatpush1.msra.mxu0 0.0
    %826 = vmatprep.subr.mxu0 0.0
    %827 = vmatpush1.msra.mxu0 0.0
    %828 = vmatprep.subr.mxu0 0.0
    %829 = vmatpush1.msra.mxu0 0.0
    %830 = vmatprep.subr.mxu0 0.0
    %831 = vmatpush1.msra.mxu0 0.0
    %832 = vmatprep.subr.mxu0 0.0
    %833 = vmatpush1.msra.mxu0 0.0
    %834 = vmatprep.subr.mxu0 0.0
    %835 = vmatpush1.msra.mxu0 0.0
    %836 = vmatprep.subr.mxu0 0.0
    %837 = vmatpush1.msra.mxu0 0.0
    %838 = vmatprep.subr.mxu0 0.0
    %839 = vmatpush1.msra.mxu0 0.0
    %840 = vmatprep.subr.mxu0 0.0
    %841 = vmatpush1.msra.mxu0 0.0
    %842 = vmatprep.subr.mxu0 0.0
    %843 = vmatpush1.msra.mxu0 0.0
    %844 = vmatprep.subr.mxu0 0.0
    %845 = vmatpush1.msra.mxu0 0.0
    %846 = vmatprep.subr.mxu0 0.0
    %847 = vmatpush1.msra.mxu0 0.0
    %848 = vmatprep.subr.mxu0 0.0
    %849 = vmatpush1.msra.mxu0 0.0
    %850 = vmatprep.mubr.f32.mxu0 0.0
    %851 = vmatmul.mubr.f32.gmra.mrb[0].mxu0 %v784
    %v852 = vpop.f32.mrb[0].mxu0
    %v853 = vadd.f32 0.0, %v852
    %v854 = vpop.f32.mrb[0].mxu0
    %855 = vdwg.mxu0
    %v857 = vrot.slane %v853, 4
    %v859 = vadd.f32 %v133, %v857
    %v860 = vtanh.pop %v859
    %v861 = vmul.f32 %v860, %v151
    %v862 = vadd.f32 %v861, %v152
    %v864 = vrot.slane %v769, 6
    %v866 = vmul.f32 %v862, %v864
    %868 = vrot.lane.b32.xlu0 %v862, 64
    %v869 = vpop.permute.xlu0 %868
    %v871 = vmul.f32 %v862, %v869
    %873 = vrot.lane.b32.xlu0 %v871, 32
    %v874 = vpop.permute.xlu0 %873
    %v876 = vadd.f32 %v866, %v874
    %v877 = vtanh.pop %v876
    %879 = vrot.lane.b32.xlu0 %v877, 64
    %v880 = vpop.permute.xlu0 %879
    %v882 = vmul.f32 %v862, %v880
    %884 = vrot.lane.b32.xlu0 %v882, 32
    %v885 = vpop.permute.xlu0 %884
    %887 = vst.msk [vmem:[#allocation2 + $0x6] sm:$0x30] %vm462, %v885
    %v888 = vrot.slane %v882, 4
    %889 = vrot.lane.b32.xlu0 %v888, 32
    %v890 = vpop.permute.xlu0 %889
    %v891 = vsel %vm153, %v890, 0
    %893 = vmatprep.subr.mxu0 0.0
    %894 = vmatpush1.msra.mxu0 %v25
    %895 = vmatprep.subr.mxu0 0.0
    %896 = vmatpush1.msra.mxu0 %v26
    %897 = vmatprep.subr.mxu0 0.0
    %898 = vmatpush1.msra.mxu0 %v27
    %899 = vmatprep.subr.mxu0 0.0
    %900 = vmatpush1.msra.mxu0 %v28
    %901 = vmatprep.subr.mxu0 0.0
    %902 = vmatpush1.msra.mxu0 0.0
    %903 = vmatprep.subr.mxu0 0.0
    %904 = vmatpush1.msra.mxu0 0.0
    %905 = vmatprep.subr.mxu0 0.0
    %906 = vmatpush1.msra.mxu0 0.0
    %907 = vmatprep.subr.mxu0 0.0
    %908 = vmatpush1.msra.mxu0 0.0
    %909 = vmatprep.subr.mxu0 0.0
    %910 = vmatpush1.msra.mxu0 0.0
    %911 = vmatprep.subr.mxu0 0.0
    %912 = vmatpush1.msra.mxu0 0.0
    %913 = vmatprep.subr.mxu0 0.0
    %914 = vmatpush1.msra.mxu0 0.0
    %915 = vmatprep.subr.mxu0 0.0
    %916 = vmatpush1.msra.mxu0 0.0
    %917 = vmatprep.subr.mxu0 0.0
    %918 = vmatpush1.msra.mxu0 0.0
    %919 = vmatprep.subr.mxu0 0.0
    %920 = vmatpush1.msra.mxu0 0.0
    %921 = vmatprep.subr.mxu0 0.0
    %922 = vmatpush1.msra.mxu0 0.0
    %923 = vmatprep.subr.mxu0 0.0
    %924 = vmatpush1.msra.mxu0 0.0
    %925 = vmatprep.subr.mxu0 0.0
    %926 = vmatpush1.msra.mxu0 0.0
    %927 = vmatprep.subr.mxu0 0.0
    %928 = vmatpush1.msra.mxu0 0.0
    %929 = vmatprep.subr.mxu0 0.0
    %930 = vmatpush1.msra.mxu0 0.0
    %931 = vmatprep.subr.mxu0 0.0
    %932 = vmatpush1.msra.mxu0 0.0
    %933 = vmatprep.subr.mxu0 0.0
    %934 = vmatpush1.msra.mxu0 0.0
    %935 = vmatprep.subr.mxu0 0.0
    %936 = vmatpush1.msra.mxu0 0.0
    %937 = vmatprep.subr.mxu0 0.0
    %938 = vmatpush1.msra.mxu0 0.0
    %939 = vmatprep.subr.mxu0 0.0
    %940 = vmatpush1.msra.mxu0 0.0
    %941 = vmatprep.subr.mxu0 0.0
    %942 = vmatpush1.msra.mxu0 0.0
    %943 = vmatprep.subr.mxu0 0.0
    %944 = vmatpush1.msra.mxu0 0.0
    %945 = vmatprep.subr.mxu0 0.0
    %946 = vmatpush1.msra.mxu0 0.0
    %947 = vmatprep.subr.mxu0 0.0
    %948 = vmatpush1.msra.mxu0 0.0
    %949 = vmatprep.subr.mxu0 0.0
    %950 = vmatpush1.msra.mxu0 0.0
    %951 = vmatprep.subr.mxu0 0.0
    %952 = vmatpush1.msra.mxu0 0.0
    %953 = vmatprep.subr.mxu0 0.0
    %954 = vmatpush1.msra.mxu0 0.0
    %955 = vmatprep.subr.mxu0 0.0
    %956 = vmatpush1.msra.mxu0 0.0
    %957 = vmatprep.mubr.f32.mxu0 0.0
    %958 = vmatmul.mubr.f32.gmra.mrb[0].mxu0 %v891
    %v959 = vpop.f32.mrb[0].mxu0
    %v960 = vadd.f32 0.0, %v959
    %v961 = vpop.f32.mrb[0].mxu0
    %962 = vdwg.mxu0
    %v964 = vrot.slane %v960, 2
    %v966 = vadd.f32 %v133, %v964
    %v967 = vtanh.pop %v966
    %v968 = vmul.f32 %v967, %v151
    %v969 = vadd.f32 %v968, %v152
    %v971 = vrot.slane %v876, 6
    %v973 = vmul.f32 %v969, %v971
    %975 = vrot.lane.b32.xlu0 %v969, 64
    %v976 = vpop.permute.xlu0 %975
    %v978 = vmul.f32 %v969, %v976
    %980 = vrot.lane.b32.xlu0 %v978, 32
    %v981 = vpop.permute.xlu0 %980
    %v983 = vadd.f32 %v973, %v981
    %v984 = vtanh.pop %v983
    %986 = vrot.lane.b32.xlu0 %v984, 64
    %v987 = vpop.permute.xlu0 %986
    %v989 = vmul.f32 %v969, %v987
    %991 = vrot.lane.b32.xlu0 %v989, 32
    %v992 = vpop.permute.xlu0 %991
    %994 = vst.msk [vmem:[#allocation2 + $0x6] sm:$0xc0] %vm570, %v992
    %v995 = vrot.slane %v989, 6
    %996 = vrot.lane.b32.xlu0 %v995, 32
    %v997 = vpop.permute.xlu0 %996
    %v998 = vsel %vm153, %v997, 0
    %1000 = vmatprep.subr.mxu0 0.0
    %1001 = vmatpush1.msra.mxu0 %v25
    %1002 = vmatprep.subr.mxu0 0.0
    %1003 = vmatpush1.msra.mxu0 %v26
    %1004 = vmatprep.subr.mxu0 0.0
    %1005 = vmatpush1.msra.mxu0 %v27
    %1006 = vmatprep.subr.mxu0 0.0
    %1007 = vmatpush1.msra.mxu0 %v28
    %1008 = vmatprep.subr.mxu0 0.0
    %1009 = vmatpush1.msra.mxu0 0.0
    %1010 = vmatprep.subr.mxu0 0.0
    %1011 = vmatpush1.msra.mxu0 0.0
    %1012 = vmatprep.subr.mxu0 0.0
    %1013 = vmatpush1.msra.mxu0 0.0
    %1014 = vmatprep.subr.mxu0 0.0
    %1015 = vmatpush1.msra.mxu0 0.0
    %1016 = vmatprep.subr.mxu0 0.0
    %1017 = vmatpush1.msra.mxu0 0.0
    %1018 = vmatprep.subr.mxu0 0.0
    %1019 = vmatpush1.msra.mxu0 0.0
    %1020 = vmatprep.subr.mxu0 0.0
    %1021 = vmatpush1.msra.mxu0 0.0
    %1022 = vmatprep.subr.mxu0 0.0
    %1023 = vmatpush1.msra.mxu0 0.0
    %1024 = vmatprep.subr.mxu0 0.0
    %1025 = vmatpush1.msra.mxu0 0.0
    %1026 = vmatprep.subr.mxu0 0.0
    %1027 = vmatpush1.msra.mxu0 0.0
    %1028 = vmatprep.subr.mxu0 0.0
    %1029 = vmatpush1.msra.mxu0 0.0
    %1030 = vmatprep.subr.mxu0 0.0
    %1031 = vmatpush1.msra.mxu0 0.0
    %1032 = vmatprep.subr.mxu0 0.0
    %1033 = vmatpush1.msra.mxu0 0.0
    %1034 = vmatprep.subr.mxu0 0.0
    %1035 = vmatpush1.msra.mxu0 0.0
    %1036 = vmatprep.subr.mxu0 0.0
    %1037 = vmatpush1.msra.mxu0 0.0
    %1038 = vmatprep.subr.mxu0 0.0
    %1039 = vmatpush1.msra.mxu0 0.0
    %1040 = vmatprep.subr.mxu0 0.0
    %1041 = vmatpush1.msra.mxu0 0.0
    %1042 = vmatprep.subr.mxu0 0.0
    %1043 = vmatpush1.msra.mxu0 0.0
    %1044 = vmatprep.subr.mxu0 0.0
    %1045 = vmatpush1.msra.mxu0 0.0
    %1046 = vmatprep.subr.mxu0 0.0
    %1047 = vmatpush1.msra.mxu0 0.0
    %1048 = vmatprep.subr.mxu0 0.0
    %1049 = vmatpush1.msra.mxu0 0.0
    %1050 = vmatprep.subr.mxu0 0.0
    %1051 = vmatpush1.msra.mxu0 0.0
    %1052 = vmatprep.subr.mxu0 0.0
    %1053 = vmatpush1.msra.mxu0 0.0
    %1054 = vmatprep.subr.mxu0 0.0
    %1055 = vmatpush1.msra.mxu0 0.0
    %1056 = vmatprep.subr.mxu0 0.0
    %1057 = vmatpush1.msra.mxu0 0.0
    %1058 = vmatprep.subr.mxu0 0.0
    %1059 = vmatpush1.msra.mxu0 0.0
    %1060 = vmatprep.subr.mxu0 0.0
    %1061 = vmatpush1.msra.mxu0 0.0
    %1062 = vmatprep.subr.mxu0 0.0
    %1063 = vmatpush1.msra.mxu0 0.0
    %1064 = vmatprep.mubr.f32.mxu0 0.0
    %1065 = vmatmul.mubr.f32.gmra.mrb[0].mxu0 %v998
    %v1066 = vpop.f32.mrb[0].mxu0
    %v1067 = vadd.f32 0.0, %v1066
    %v1068 = vpop.f32.mrb[0].mxu0
    %1069 = vdwg.mxu0
    %v1070 = vadd.f32 %v138, %v1067
    %v1071 = vtanh.pop %v1070
    %v1072 = vmul.f32 %v1071, %v151
    %v1073 = vadd.f32 %v1072, %v152
    %v1075 = vrot.slane %v983, 6
    %v1077 = vmul.f32 %v1073, %v1075
    %1079 = vrot.lane.b32.xlu0 %v1073, 64
    %v1080 = vpop.permute.xlu0 %1079
    %v1082 = vmul.f32 %v1073, %v1080
    %1084 = vrot.lane.b32.xlu0 %v1082, 32
    %v1085 = vpop.permute.xlu0 %1084
    %v1087 = vadd.f32 %v1077, %v1085
    %v1088 = vtanh.pop %v1087
    %1090 = vrot.lane.b32.xlu0 %v1088, 64
    %v1091 = vpop.permute.xlu0 %1090
    %v1093 = vmul.f32 %v1073, %v1091
    %1095 = vrot.lane.b32.xlu0 %v1093, 32
    %v1096 = vpop.permute.xlu0 %1095
    %1098 = vst.msk [vmem:[#allocation2 + $0xe] sm:$0x3] %vm675, %v1096
    %v1099 = vsel %vm153, %v1096, 0
    %1101 = vmatprep.subr.mxu0 0.0
    %1102 = vmatpush1.msra.mxu0 %v25
    %1103 = vmatprep.subr.mxu0 0.0
    %1104 = vmatpush1.msra.mxu0 %v26
    %1105 = vmatprep.subr.mxu0 0.0
    %1106 = vmatpush1.msra.mxu0 %v27
    %1107 = vmatprep.subr.mxu0 0.0
    %1108 = vmatpush1.msra.mxu0 %v28
    %1109 = vmatprep.subr.mxu0 0.0
    %1110 = vmatpush1.msra.mxu0 0.0
    %1111 = vmatprep.subr.mxu0 0.0
    %1112 = vmatpush1.msra.mxu0 0.0
    %1113 = vmatprep.subr.mxu0 0.0
    %1114 = vmatpush1.msra.mxu0 0.0
    %1115 = vmatprep.subr.mxu0 0.0
    %1116 = vmatpush1.msra.mxu0 0.0
    %1117 = vmatprep.subr.mxu0 0.0
    %1118 = vmatpush1.msra.mxu0 0.0
    %1119 = vmatprep.subr.mxu0 0.0
    %1120 = vmatpush1.msra.mxu0 0.0
    %1121 = vmatprep.subr.mxu0 0.0
    %1122 = vmatpush1.msra.mxu0 0.0
    %1123 = vmatprep.subr.mxu0 0.0
    %1124 = vmatpush1.msra.mxu0 0.0
    %1125 = vmatprep.subr.mxu0 0.0
    %1126 = vmatpush1.msra.mxu0 0.0
    %1127 = vmatprep.subr.mxu0 0.0
    %1128 = vmatpush1.msra.mxu0 0.0
    %1129 = vmatprep.subr.mxu0 0.0
    %1130 = vmatpush1.msra.mxu0 0.0
    %1131 = vmatprep.subr.mxu0 0.0
    %1132 = vmatpush1.msra.mxu0 0.0
    %1133 = vmatprep.subr.mxu0 0.0
    %1134 = vmatpush1.msra.mxu0 0.0
    %1135 = vmatprep.subr.mxu0 0.0
    %1136 = vmatpush1.msra.mxu0 0.0
    %1137 = vmatprep.subr.mxu0 0.0
    %1138 = vmatpush1.msra.mxu0 0.0
    %1139 = vmatprep.subr.mxu0 0.0
    %1140 = vmatpush1.msra.mxu0 0.0
    %1141 = vmatprep.subr.mxu0 0.0
    %1142 = vmatpush1.msra.mxu0 0.0
    %1143 = vmatprep.subr.mxu0 0.0
    %1144 = vmatpush1.msra.mxu0 0.0
    %1145 = vmatprep.subr.mxu0 0.0
    %1146 = vmatpush1.msra.mxu0 0.0
    %1147 = vmatprep.subr.mxu0 0.0
    %1148 = vmatpush1.msra.mxu0 0.0
    %1149 = vmatprep.subr.mxu0 0.0
    %1150 = vmatpush1.msra.mxu0 0.0
    %1151 = vmatprep.subr.mxu0 0.0
    %1152 = vmatpush1.msra.mxu0 0.0
    %1153 = vmatprep.subr.mxu0 0.0
    %1154 = vmatpush1.msra.mxu0 0.0
    %1155 = vmatprep.subr.mxu0 0.0
    %1156 = vmatpush1.msra.mxu0 0.0
    %1157 = vmatprep.subr.mxu0 0.0
    %1158 = vmatpush1.msra.mxu0 0.0
    %1159 = vmatprep.subr.mxu0 0.0
    %1160 = vmatpush1.msra.mxu0 0.0
    %1161 = vmatprep.subr.mxu0 0.0
    %1162 = vmatpush1.msra.mxu0 0.0
    %1163 = vmatprep.subr.mxu0 0.0
    %1164 = vmatpush1.msra.mxu0 0.0
    %1165 = vmatprep.mubr.f32.mxu0 0.0
    %1166 = vmatmul.mubr.f32.gmra.mrb[0].mxu0 %v1099
    %v1167 = vpop.f32.mrb[0].mxu0
    %v1168 = vadd.f32 0.0, %v1167
    %v1169 = vpop.f32.mrb[0].mxu0
    %1170 = vdwg.mxu0
    %v1172 = vrot.slane %v1168, 6
    %v1174 = vadd.f32 %v138, %v1172
    %v1175 = vtanh.pop %v1174
    %v1176 = vmul.f32 %v1175, %v151
    %v1177 = vadd.f32 %v1176, %v152
    %v1179 = vrot.slane %v1087, 6
    %v1181 = vmul.f32 %v1177, %v1179
    %1183 = vrot.lane.b32.xlu0 %v1177, 64
    %v1184 = vpop.permute.xlu0 %1183
    %v1186 = vmul.f32 %v1177, %v1184
    %1188 = vrot.lane.b32.xlu0 %v1186, 32
    %v1189 = vpop.permute.xlu0 %1188
    %v1191 = vadd.f32 %v1181, %v1189
    %v1192 = vtanh.pop %v1191
    %1194 = vrot.lane.b32.xlu0 %v1192, 64
    %v1195 = vpop.permute.xlu0 %1194
    %v1197 = vmul.f32 %v1177, %v1195
    %1199 = vrot.lane.b32.xlu0 %v1197, 32
    %v1200 = vpop.permute.xlu0 %1199
    %1202 = vst.msk [vmem:[#allocation2 + $0xe] sm:$0xc] %vm354, %v1200
    %v1203 = vrot.slane %v1197, 2
    %1204 = vrot.lane.b32.xlu0 %v1203, 32
    %v1205 = vpop.permute.xlu0 %1204
    %v1206 = vsel %vm153, %v1205, 0
    %1208 = vmatprep.subr.mxu0 0.0
    %1209 = vmatpush1.msra.mxu0 %v25
    %1210 = vmatprep.subr.mxu0 0.0
    %1211 = vmatpush1.msra.mxu0 %v26
    %1212 = vmatprep.subr.mxu0 0.0
    %1213 = vmatpush1.msra.mxu0 %v27
    %1214 = vmatprep.subr.mxu0 0.0
    %1215 = vmatpush1.msra.mxu0 %v28
    %1216 = vmatprep.subr.mxu0 0.0
    %1217 = vmatpush1.msra.mxu0 0.0
    %1218 = vmatprep.subr.mxu0 0.0
    %1219 = vmatpush1.msra.mxu0 0.0
    %1220 = vmatprep.subr.mxu0 0.0
    %1221 = vmatpush1.msra.mxu0 0.0
    %1222 = vmatprep.subr.mxu0 0.0
    %1223 = vmatpush1.msra.mxu0 0.0
    %1224 = vmatprep.subr.mxu0 0.0
    %1225 = vmatpush1.msra.mxu0 0.0
    %1226 = vmatprep.subr.mxu0 0.0
    %1227 = vmatpush1.msra.mxu0 0.0
    %1228 = vmatprep.subr.mxu0 0.0
    %1229 = vmatpush1.msra.mxu0 0.0
    %1230 = vmatprep.subr.mxu0 0.0
    %1231 = vmatpush1.msra.mxu0 0.0
    %1232 = vmatprep.subr.mxu0 0.0
    %1233 = vmatpush1.msra.mxu0 0.0
    %1234 = vmatprep.subr.mxu0 0.0
    %1235 = vmatpush1.msra.mxu0 0.0
    %1236 = vmatprep.subr.mxu0 0.0
    %1237 = vmatpush1.msra.mxu0 0.0
    %1238 = vmatprep.subr.mxu0 0.0
    %1239 = vmatpush1.msra.mxu0 0.0
    %1240 = vmatprep.subr.mxu0 0.0
    %1241 = vmatpush1.msra.mxu0 0.0
    %1242 = vmatprep.subr.mxu0 0.0
    %1243 = vmatpush1.msra.mxu0 0.0
    %1244 = vmatprep.subr.mxu0 0.0
    %1245 = vmatpush1.msra.mxu0 0.0
    %1246 = vmatprep.subr.mxu0 0.0
    %1247 = vmatpush1.msra.mxu0 0.0
    %1248 = vmatprep.subr.mxu0 0.0
    %1249 = vmatpush1.msra.mxu0 0.0
    %1250 = vmatprep.subr.mxu0 0.0
    %1251 = vmatpush1.msra.mxu0 0.0
    %1252 = vmatprep.subr.mxu0 0.0
    %1253 = vmatpush1.msra.mxu0 0.0
    %1254 = vmatprep.subr.mxu0 0.0
    %1255 = vmatpush1.msra.mxu0 0.0
    %1256 = vmatprep.subr.mxu0 0.0
    %1257 = vmatpush1.msra.mxu0 0.0
    %1258 = vmatprep.subr.mxu0 0.0
    %1259 = vmatpush1.msra.mxu0 0.0
    %1260 = vmatprep.subr.mxu0 0.0
    %1261 = vmatpush1.msra.mxu0 0.0
    %1262 = vmatprep.subr.mxu0 0.0
    %1263 = vmatpush1.msra.mxu0 0.0
    %1264 = vmatprep.subr.mxu0 0.0
    %1265 = vmatpush1.msra.mxu0 0.0
    %1266 = vmatprep.subr.mxu0 0.0
    %1267 = vmatpush1.msra.mxu0 0.0
    %1268 = vmatprep.subr.mxu0 0.0
    %1269 = vmatpush1.msra.mxu0 0.0
    %1270 = vmatprep.subr.mxu0 0.0
    %1271 = vmatpush1.msra.mxu0 0.0
    %1272 = vmatprep.mubr.f32.mxu0 0.0
    %1273 = vmatmul.mubr.f32.gmra.mrb[0].mxu0 %v1206
    %v1274 = vpop.f32.mrb[0].mxu0
    %v1275 = vadd.f32 0.0, %v1274
    %v1276 = vpop.f32.mrb[0].mxu0
    %1277 = vdwg.mxu0
    %v1279 = vrot.slane %v1275, 4
    %v1281 = vadd.f32 %v138, %v1279
    %v1282 = vtanh.pop %v1281
    %v1283 = vmul.f32 %v1282, %v151
    %v1284 = vadd.f32 %v1283, %v152
    %v1286 = vrot.slane %v1191, 6
    %v1288 = vmul.f32 %v1284, %v1286
    %1290 = vrot.lane.b32.xlu0 %v1284, 64
    %v1291 = vpop.permute.xlu0 %1290
    %v1293 = vmul.f32 %v1284, %v1291
    %1295 = vrot.lane.b32.xlu0 %v1293, 32
    %v1296 = vpop.permute.xlu0 %1295
    %v1298 = vadd.f32 %v1288, %v1296
    %v1299 = vtanh.pop %v1298
    %1301 = vrot.lane.b32.xlu0 %v1299, 64
    %v1302 = vpop.permute.xlu0 %1301
    %v1304 = vmul.f32 %v1284, %v1302
    %1306 = vrot.lane.b32.xlu0 %v1304, 32
    %v1307 = vpop.permute.xlu0 %1306
    %1309 = vst.msk [vmem:[#allocation2 + $0xe] sm:$0x30] %vm462, %v1307
    %v1310 = vrot.slane %v1304, 4
    %1311 = vrot.lane.b32.xlu0 %v1310, 32
    %v1312 = vpop.permute.xlu0 %1311
    %v1313 = vsel %vm153, %v1312, 0
    %1315 = vmatprep.subr.mxu0 0.0
    %1316 = vmatpush1.msra.mxu0 %v25
    %1317 = vmatprep.subr.mxu0 0.0
    %1318 = vmatpush1.msra.mxu0 %v26
    %1319 = vmatprep.subr.mxu0 0.0
    %1320 = vmatpush1.msra.mxu0 %v27
    %1321 = vmatprep.subr.mxu0 0.0
    %1322 = vmatpush1.msra.mxu0 %v28
    %1323 = vmatprep.subr.mxu0 0.0
    %1324 = vmatpush1.msra.mxu0 0.0
    %1325 = vmatprep.subr.mxu0 0.0
    %1326 = vmatpush1.msra.mxu0 0.0
    %1327 = vmatprep.subr.mxu0 0.0
    %1328 = vmatpush1.msra.mxu0 0.0
    %1329 = vmatprep.subr.mxu0 0.0
    %1330 = vmatpush1.msra.mxu0 0.0
    %1331 = vmatprep.subr.mxu0 0.0
    %1332 = vmatpush1.msra.mxu0 0.0
    %1333 = vmatprep.subr.mxu0 0.0
    %1334 = vmatpush1.msra.mxu0 0.0
    %1335 = vmatprep.subr.mxu0 0.0
    %1336 = vmatpush1.msra.mxu0 0.0
    %1337 = vmatprep.subr.mxu0 0.0
    %1338 = vmatpush1.msra.mxu0 0.0
    %1339 = vmatprep.subr.mxu0 0.0
    %1340 = vmatpush1.msra.mxu0 0.0
    %1341 = vmatprep.subr.mxu0 0.0
    %1342 = vmatpush1.msra.mxu0 0.0
    %1343 = vmatprep.subr.mxu0 0.0
    %1344 = vmatpush1.msra.mxu0 0.0
    %1345 = vmatprep.subr.mxu0 0.0
    %1346 = vmatpush1.msra.mxu0 0.0
    %1347 = vmatprep.subr.mxu0 0.0
    %1348 = vmatpush1.msra.mxu0 0.0
    %1349 = vmatprep.subr.mxu0 0.0
    %1350 = vmatpush1.msra.mxu0 0.0
    %1351 = vmatprep.subr.mxu0 0.0
    %1352 = vmatpush1.msra.mxu0 0.0
    %1353 = vmatprep.subr.mxu0 0.0
    %1354 = vmatpush1.msra.mxu0 0.0
    %1355 = vmatprep.subr.mxu0 0.0
    %1356 = vmatpush1.msra.mxu0 0.0
    %1357 = vmatprep.subr.mxu0 0.0
    %1358 = vmatpush1.msra.mxu0 0.0
    %1359 = vmatprep.subr.mxu0 0.0
    %1360 = vmatpush1.msra.mxu0 0.0
    %1361 = vmatprep.subr.mxu0 0.0
    %1362 = vmatpush1.msra.mxu0 0.0
    %1363 = vmatprep.subr.mxu0 0.0
    %1364 = vmatpush1.msra.mxu0 0.0
    %1365 = vmatprep.subr.mxu0 0.0
    %1366 = vmatpush1.msra.mxu0 0.0
    %1367 = vmatprep.subr.mxu0 0.0
    %1368 = vmatpush1.msra.mxu0 0.0
    %1369 = vmatprep.subr.mxu0 0.0
    %1370 = vmatpush1.msra.mxu0 0.0
    %1371 = vmatprep.subr.mxu0 0.0
    %1372 = vmatpush1.msra.mxu0 0.0
    %1373 = vmatprep.subr.mxu0 0.0
    %1374 = vmatpush1.msra.mxu0 0.0
    %1375 = vmatprep.subr.mxu0 0.0
    %1376 = vmatpush1.msra.mxu0 0.0
    %1377 = vmatprep.subr.mxu0 0.0
    %1378 = vmatpush1.msra.mxu0 0.0
    %1379 = vmatprep.mubr.f32.mxu0 0.0
    %1380 = vmatmul.mubr.f32.gmra.mrb[0].mxu0 %v1313
    %v1381 = vpop.f32.mrb[0].mxu0
    %v1382 = vadd.f32 0.0, %v1381
    %v1383 = vpop.f32.mrb[0].mxu0
    %1384 = vdwg.mxu0
    %v1386 = vrot.slane %v1382, 2
    %v1388 = vadd.f32 %v138, %v1386
    %v1389 = vtanh.pop %v1388
    %v1390 = vmul.f32 %v1389, %v151
    %v1391 = vadd.f32 %v1390, %v152
    %v1393 = vrot.slane %v1298, 6
    %v1395 = vmul.f32 %v1391, %v1393
    %1397 = vrot.lane.b32.xlu0 %v1391, 64
    %v1398 = vpop.permute.xlu0 %1397
    %v1400 = vmul.f32 %v1391, %v1398
    %1402 = vrot.lane.b32.xlu0 %v1400, 32
    %v1403 = vpop.permute.xlu0 %1402
    %v1405 = vadd.f32 %v1395, %v1403
    %v1406 = vtanh.pop %v1405
    %1408 = vrot.lane.b32.xlu0 %v1406, 64
    %v1409 = vpop.permute.xlu0 %1408
    %v1411 = vmul.f32 %v1391, %v1409
    %1413 = vrot.lane.b32.xlu0 %v1411, 32
    %v1414 = vpop.permute.xlu0 %1413
    %1416 = vst.msk [vmem:[#allocation2 + $0xe] sm:$0xc0] %vm570, %v1414
    %v1417 = vrot.slane %v1411, 6
    %1418 = vrot.lane.b32.xlu0 %v1417, 32
    %v1419 = vpop.permute.xlu0 %1418
    %v1420 = vsel %vm153, %v1419, 0
    %1422 = vmatprep.subr.mxu0 0.0
    %1423 = vmatpush1.msra.mxu0 %v25
    %1424 = vmatprep.subr.mxu0 0.0
    %1425 = vmatpush1.msra.mxu0 %v26
    %1426 = vmatprep.subr.mxu0 0.0
    %1427 = vmatpush1.msra.mxu0 %v27
    %1428 = vmatprep.subr.mxu0 0.0
    %1429 = vmatpush1.msra.mxu0 %v28
    %1430 = vmatprep.subr.mxu0 0.0
    %1431 = vmatpush1.msra.mxu0 0.0
    %1432 = vmatprep.subr.mxu0 0.0
    %1433 = vmatpush1.msra.mxu0 0.0
    %1434 = vmatprep.subr.mxu0 0.0
    %1435 = vmatpush1.msra.mxu0 0.0
    %1436 = vmatprep.subr.mxu0 0.0
    %1437 = vmatpush1.msra.mxu0 0.0
    %1438 = vmatprep.subr.mxu0 0.0
    %1439 = vmatpush1.msra.mxu0 0.0
    %1440 = vmatprep.subr.mxu0 0.0
    %1441 = vmatpush1.msra.mxu0 0.0
    %1442 = vmatprep.subr.mxu0 0.0
    %1443 = vmatpush1.msra.mxu0 0.0
    %1444 = vmatprep.subr.mxu0 0.0
    %1445 = vmatpush1.msra.mxu0 0.0
    %1446 = vmatprep.subr.mxu0 0.0
    %1447 = vmatpush1.msra.mxu0 0.0
    %1448 = vmatprep.subr.mxu0 0.0
    %1449 = vmatpush1.msra.mxu0 0.0
    %1450 = vmatprep.subr.mxu0 0.0
    %1451 = vmatpush1.msra.mxu0 0.0
    %1452 = vmatprep.subr.mxu0 0.0
    %1453 = vmatpush1.msra.mxu0 0.0
    %1454 = vmatprep.subr.mxu0 0.0
    %1455 = vmatpush1.msra.mxu0 0.0
    %1456 = vmatprep.subr.mxu0 0.0
    %1457 = vmatpush1.msra.mxu0 0.0
    %1458 = vmatprep.subr.mxu0 0.0
    %1459 = vmatpush1.msra.mxu0 0.0
    %1460 = vmatprep.subr.mxu0 0.0
    %1461 = vmatpush1.msra.mxu0 0.0
    %1462 = vmatprep.subr.mxu0 0.0
    %1463 = vmatpush1.msra.mxu0 0.0
    %1464 = vmatprep.subr.mxu0 0.0
    %1465 = vmatpush1.msra.mxu0 0.0
    %1466 = vmatprep.subr.mxu0 0.0
    %1467 = vmatpush1.msra.mxu0 0.0
    %1468 = vmatprep.subr.mxu0 0.0
    %1469 = vmatpush1.msra.mxu0 0.0
    %1470 = vmatprep.subr.mxu0 0.0
    %1471 = vmatpush1.msra.mxu0 0.0
    %1472 = vmatprep.subr.mxu0 0.0
    %1473 = vmatpush1.msra.mxu0 0.0
    %1474 = vmatprep.subr.mxu0 0.0
    %1475 = vmatpush1.msra.mxu0 0.0
    %1476 = vmatprep.subr.mxu0 0.0
    %1477 = vmatpush1.msra.mxu0 0.0
    %1478 = vmatprep.subr.mxu0 0.0
    %1479 = vmatpush1.msra.mxu0 0.0
    %1480 = vmatprep.subr.mxu0 0.0
    %1481 = vmatpush1.msra.mxu0 0.0
    %1482 = vmatprep.subr.mxu0 0.0
    %1483 = vmatpush1.msra.mxu0 0.0
    %1484 = vmatprep.subr.mxu0 0.0
    %1485 = vmatpush1.msra.mxu0 0.0
    %1486 = vmatprep.mubr.f32.mxu0 0.0
    %1487 = vmatmul.mubr.f32.gmra.mrb[0].mxu0 %v1420
    %v1488 = vpop.f32.mrb[0].mxu0
    %v1489 = vadd.f32 0.0, %v1488
    %v1490 = vpop.f32.mrb[0].mxu0
    %1491 = vdwg.mxu0
    %v1492 = vadd.f32 %v143, %v1489
    %v1493 = vtanh.pop %v1492
    %v1494 = vmul.f32 %v1493, %v151
    %v1495 = vadd.f32 %v1494, %v152
    %v1497 = vrot.slane %v1405, 6
    %v1499 = vmul.f32 %v1495, %v1497
    %1501 = vrot.lane.b32.xlu0 %v1495, 64
    %v1502 = vpop.permute.xlu0 %1501
    %v1504 = vmul.f32 %v1495, %v1502
    %1506 = vrot.lane.b32.xlu0 %v1504, 32
    %v1507 = vpop.permute.xlu0 %1506
    %v1509 = vadd.f32 %v1499, %v1507
    %v1510 = vtanh.pop %v1509
    %1512 = vrot.lane.b32.xlu0 %v1510, 64
    %v1513 = vpop.permute.xlu0 %1512
    %v1515 = vmul.f32 %v1495, %v1513
    %1517 = vrot.lane.b32.xlu0 %v1515, 32
    %v1518 = vpop.permute.xlu0 %1517
    %1520 = vst.msk [vmem:[#allocation2 + $0x16] sm:$0x3] %vm675, %v1518
    %v1521 = vsel %vm153, %v1518, 0
    %1523 = vmatprep.subr.mxu0 0.0
    %1524 = vmatpush1.msra.mxu0 %v25
    %1525 = vmatprep.subr.mxu0 0.0
    %1526 = vmatpush1.msra.mxu0 %v26
    %1527 = vmatprep.subr.mxu0 0.0
    %1528 = vmatpush1.msra.mxu0 %v27
    %1529 = vmatprep.subr.mxu0 0.0
    %1530 = vmatpush1.msra.mxu0 %v28
    %1531 = vmatprep.subr.mxu0 0.0
    %1532 = vmatpush1.msra.mxu0 0.0
    %1533 = vmatprep.subr.mxu0 0.0
    %1534 = vmatpush1.msra.mxu0 0.0
    %1535 = vmatprep.subr.mxu0 0.0
    %1536 = vmatpush1.msra.mxu0 0.0
    %1537 = vmatprep.subr.mxu0 0.0
    %1538 = vmatpush1.msra.mxu0 0.0
    %1539 = vmatprep.subr.mxu0 0.0
    %1540 = vmatpush1.msra.mxu0 0.0
    %1541 = vmatprep.subr.mxu0 0.0
    %1542 = vmatpush1.msra.mxu0 0.0
    %1543 = vmatprep.subr.mxu0 0.0
    %1544 = vmatpush1.msra.mxu0 0.0
    %1545 = vmatprep.subr.mxu0 0.0
    %1546 = vmatpush1.msra.mxu0 0.0
    %1547 = vmatprep.subr.mxu0 0.0
    %1548 = vmatpush1.msra.mxu0 0.0
    %1549 = vmatprep.subr.mxu0 0.0
    %1550 = vmatpush1.msra.mxu0 0.0
    %1551 = vmatprep.subr.mxu0 0.0
    %1552 = vmatpush1.msra.mxu0 0.0
    %1553 = vmatprep.subr.mxu0 0.0
    %1554 = vmatpush1.msra.mxu0 0.0
    %1555 = vmatprep.subr.mxu0 0.0
    %1556 = vmatpush1.msra.mxu0 0.0
    %1557 = vmatprep.subr.mxu0 0.0
    %1558 = vmatpush1.msra.mxu0 0.0
    %1559 = vmatprep.subr.mxu0 0.0
    %1560 = vmatpush1.msra.mxu0 0.0
    %1561 = vmatprep.subr.mxu0 0.0
    %1562 = vmatpush1.msra.mxu0 0.0
    %1563 = vmatprep.subr.mxu0 0.0
    %1564 = vmatpush1.msra.mxu0 0.0
    %1565 = vmatprep.subr.mxu0 0.0
    %1566 = vmatpush1.msra.mxu0 0.0
    %1567 = vmatprep.subr.mxu0 0.0
    %1568 = vmatpush1.msra.mxu0 0.0
    %1569 = vmatprep.subr.mxu0 0.0
    %1570 = vmatpush1.msra.mxu0 0.0
    %1571 = vmatprep.subr.mxu0 0.0
    %1572 = vmatpush1.msra.mxu0 0.0
    %1573 = vmatprep.subr.mxu0 0.0
    %1574 = vmatpush1.msra.mxu0 0.0
    %1575 = vmatprep.subr.mxu0 0.0
    %1576 = vmatpush1.msra.mxu0 0.0
    %1577 = vmatprep.subr.mxu0 0.0
    %1578 = vmatpush1.msra.mxu0 0.0
    %1579 = vmatprep.subr.mxu0 0.0
    %1580 = vmatpush1.msra.mxu0 0.0
    %1581 = vmatprep.subr.mxu0 0.0
    %1582 = vmatpush1.msra.mxu0 0.0
    %1583 = vmatprep.subr.mxu0 0.0
    %1584 = vmatpush1.msra.mxu0 0.0
    %1585 = vmatprep.subr.mxu0 0.0
    %1586 = vmatpush1.msra.mxu0 0.0
    %1587 = vmatprep.mubr.f32.mxu0 0.0
    %1588 = vmatmul.mubr.f32.gmra.mrb[0].mxu0 %v1521
    %v1589 = vpop.f32.mrb[0].mxu0
    %v1590 = vadd.f32 0.0, %v1589
    %v1591 = vpop.f32.mrb[0].mxu0
    %1592 = vdwg.mxu0
    %v1594 = vrot.slane %v1590, 6
    %v1596 = vadd.f32 %v143, %v1594
    %v1597 = vtanh.pop %v1596
    %v1598 = vmul.f32 %v1597, %v151
    %v1599 = vadd.f32 %v1598, %v152
    %v1601 = vrot.slane %v1509, 6
    %v1603 = vmul.f32 %v1599, %v1601
    %1605 = vrot.lane.b32.xlu0 %v1599, 64
    %v1606 = vpop.permute.xlu0 %1605
    %v1608 = vmul.f32 %v1599, %v1606
    %1610 = vrot.lane.b32.xlu0 %v1608, 32
    %v1611 = vpop.permute.xlu0 %1610
    %v1613 = vadd.f32 %v1603, %v1611
    %v1614 = vtanh.pop %v1613
    %1616 = vrot.lane.b32.xlu0 %v1614, 64
    %v1617 = vpop.permute.xlu0 %1616
    %v1619 = vmul.f32 %v1599, %v1617
    %1621 = vrot.lane.b32.xlu0 %v1619, 32
    %v1622 = vpop.permute.xlu0 %1621
    %1624 = vst.msk [vmem:[#allocation2 + $0x16] sm:$0xc] %vm354, %v1622
    %v1625 = vrot.slane %v1619, 2
    %1626 = vrot.lane.b32.xlu0 %v1625, 32
    %v1627 = vpop.permute.xlu0 %1626
    %v1628 = vsel %vm153, %v1627, 0
    %1630 = vmatprep.subr.mxu0 0.0
    %1631 = vmatpush1.msra.mxu0 %v25
    %1632 = vmatprep.subr.mxu0 0.0
    %1633 = vmatpush1.msra.mxu0 %v26
    %1634 = vmatprep.subr.mxu0 0.0
    %1635 = vmatpush1.msra.mxu0 %v27
    %1636 = vmatprep.subr.mxu0 0.0
    %1637 = vmatpush1.msra.mxu0 %v28
    %1638 = vmatprep.subr.mxu0 0.0
    %1639 = vmatpush1.msra.mxu0 0.0
    %1640 = vmatprep.subr.mxu0 0.0
    %1641 = vmatpush1.msra.mxu0 0.0
    %1642 = vmatprep.subr.mxu0 0.0
    %1643 = vmatpush1.msra.mxu0 0.0
    %1644 = vmatprep.subr.mxu0 0.0
    %1645 = vmatpush1.msra.mxu0 0.0
    %1646 = vmatprep.subr.mxu0 0.0
    %1647 = vmatpush1.msra.mxu0 0.0
    %1648 = vmatprep.subr.mxu0 0.0
    %1649 = vmatpush1.msra.mxu0 0.0
    %1650 = vmatprep.subr.mxu0 0.0
    %1651 = vmatpush1.msra.mxu0 0.0
    %1652 = vmatprep.subr.mxu0 0.0
    %1653 = vmatpush1.msra.mxu0 0.0
    %1654 = vmatprep.subr.mxu0 0.0
    %1655 = vmatpush1.msra.mxu0 0.0
    %1656 = vmatprep.subr.mxu0 0.0
    %1657 = vmatpush1.msra.mxu0 0.0
    %1658 = vmatprep.subr.mxu0 0.0
    %1659 = vmatpush1.msra.mxu0 0.0
    %1660 = vmatprep.subr.mxu0 0.0
    %1661 = vmatpush1.msra.mxu0 0.0
    %1662 = vmatprep.subr.mxu0 0.0
    %1663 = vmatpush1.msra.mxu0 0.0
    %1664 = vmatprep.subr.mxu0 0.0
    %1665 = vmatpush1.msra.mxu0 0.0
    %1666 = vmatprep.subr.mxu0 0.0
    %1667 = vmatpush1.msra.mxu0 0.0
    %1668 = vmatprep.subr.mxu0 0.0
    %1669 = vmatpush1.msra.mxu0 0.0
    %1670 = vmatprep.subr.mxu0 0.0
    %1671 = vmatpush1.msra.mxu0 0.0
    %1672 = vmatprep.subr.mxu0 0.0
    %1673 = vmatpush1.msra.mxu0 0.0
    %1674 = vmatprep.subr.mxu0 0.0
    %1675 = vmatpush1.msra.mxu0 0.0
    %1676 = vmatprep.subr.mxu0 0.0
    %1677 = vmatpush1.msra.mxu0 0.0
    %1678 = vmatprep.subr.mxu0 0.0
    %1679 = vmatpush1.msra.mxu0 0.0
    %1680 = vmatprep.subr.mxu0 0.0
    %1681 = vmatpush1.msra.mxu0 0.0
    %1682 = vmatprep.subr.mxu0 0.0
    %1683 = vmatpush1.msra.mxu0 0.0
    %1684 = vmatprep.subr.mxu0 0.0
    %1685 = vmatpush1.msra.mxu0 0.0
    %1686 = vmatprep.subr.mxu0 0.0
    %1687 = vmatpush1.msra.mxu0 0.0
    %1688 = vmatprep.subr.mxu0 0.0
    %1689 = vmatpush1.msra.mxu0 0.0
    %1690 = vmatprep.subr.mxu0 0.0
    %1691 = vmatpush1.msra.mxu0 0.0
    %1692 = vmatprep.subr.mxu0 0.0
    %1693 = vmatpush1.msra.mxu0 0.0
    %1694 = vmatprep.mubr.f32.mxu0 0.0
    %1695 = vmatmul.mubr.f32.gmra.mrb[0].mxu0 %v1628
    %v1696 = vpop.f32.mrb[0].mxu0
    %v1697 = vadd.f32 0.0, %v1696
    %v1698 = vpop.f32.mrb[0].mxu0
    %1699 = vdwg.mxu0
    %v1701 = vrot.slane %v1697, 4
    %v1703 = vadd.f32 %v143, %v1701
    %v1704 = vtanh.pop %v1703
    %v1705 = vmul.f32 %v1704, %v151
    %v1706 = vadd.f32 %v1705, %v152
    %v1708 = vrot.slane %v1613, 6
    %v1710 = vmul.f32 %v1706, %v1708
    %1712 = vrot.lane.b32.xlu0 %v1706, 64
    %v1713 = vpop.permute.xlu0 %1712
    %v1715 = vmul.f32 %v1706, %v1713
    %1717 = vrot.lane.b32.xlu0 %v1715, 32
    %v1718 = vpop.permute.xlu0 %1717
    %v1720 = vadd.f32 %v1710, %v1718
    %v1721 = vtanh.pop %v1720
    %1723 = vrot.lane.b32.xlu0 %v1721, 64
    %v1724 = vpop.permute.xlu0 %1723
    %v1726 = vmul.f32 %v1706, %v1724
    %1728 = vrot.lane.b32.xlu0 %v1726, 32
    %v1729 = vpop.permute.xlu0 %1728
    %1731 = vst.msk [vmem:[#allocation2 + $0x16] sm:$0x30] %vm462, %v1729
    %v1732 = vrot.slane %v1726, 4
    %1733 = vrot.lane.b32.xlu0 %v1732, 32
    %v1734 = vpop.permute.xlu0 %1733
    %v1735 = vsel %vm153, %v1734, 0
    %1737 = vmatprep.subr.mxu0 0.0
    %1738 = vmatpush1.msra.mxu0 %v25
    %1739 = vmatprep.subr.mxu0 0.0
    %1740 = vmatpush1.msra.mxu0 %v26
    %1741 = vmatprep.subr.mxu0 0.0
    %1742 = vmatpush1.msra.mxu0 %v27
    %1743 = vmatprep.subr.mxu0 0.0
    %1744 = vmatpush1.msra.mxu0 %v28
    %1745 = vmatprep.subr.mxu0 0.0
    %1746 = vmatpush1.msra.mxu0 0.0
    %1747 = vmatprep.subr.mxu0 0.0
    %1748 = vmatpush1.msra.mxu0 0.0
    %1749 = vmatprep.subr.mxu0 0.0
    %1750 = vmatpush1.msra.mxu0 0.0
    %1751 = vmatprep.subr.mxu0 0.0
    %1752 = vmatpush1.msra.mxu0 0.0
    %1753 = vmatprep.subr.mxu0 0.0
    %1754 = vmatpush1.msra.mxu0 0.0
    %1755 = vmatprep.subr.mxu0 0.0
    %1756 = vmatpush1.msra.mxu0 0.0
    %1757 = vmatprep.subr.mxu0 0.0
    %1758 = vmatpush1.msra.mxu0 0.0
    %1759 = vmatprep.subr.mxu0 0.0
    %1760 = vmatpush1.msra.mxu0 0.0
    %1761 = vmatprep.subr.mxu0 0.0
    %1762 = vmatpush1.msra.mxu0 0.0
    %1763 = vmatprep.subr.mxu0 0.0
    %1764 = vmatpush1.msra.mxu0 0.0
    %1765 = vmatprep.subr.mxu0 0.0
    %1766 = vmatpush1.msra.mxu0 0.0
    %1767 = vmatprep.subr.mxu0 0.0
    %1768 = vmatpush1.msra.mxu0 0.0
    %1769 = vmatprep.subr.mxu0 0.0
    %1770 = vmatpush1.msra.mxu0 0.0
    %1771 = vmatprep.subr.mxu0 0.0
    %1772 = vmatpush1.msra.mxu0 0.0
    %1773 = vmatprep.subr.mxu0 0.0
    %1774 = vmatpush1.msra.mxu0 0.0
    %1775 = vmatprep.subr.mxu0 0.0
    %1776 = vmatpush1.msra.mxu0 0.0
    %1777 = vmatprep.subr.mxu0 0.0
    %1778 = vmatpush1.msra.mxu0 0.0
    %1779 = vmatprep.subr.mxu0 0.0
    %1780 = vmatpush1.msra.mxu0 0.0
    %1781 = vmatprep.subr.mxu0 0.0
    %1782 = vmatpush1.msra.mxu0 0.0
    %1783 = vmatprep.subr.mxu0 0.0
    %1784 = vmatpush1.msra.mxu0 0.0
    %1785 = vmatprep.subr.mxu0 0.0
    %1786 = vmatpush1.msra.mxu0 0.0
    %1787 = vmatprep.subr.mxu0 0.0
    %1788 = vmatpush1.msra.mxu0 0.0
    %1789 = vmatprep.subr.mxu0 0.0
    %1790 = vmatpush1.msra.mxu0 0.0
    %1791 = vmatprep.subr.mxu0 0.0
    %1792 = vmatpush1.msra.mxu0 0.0
    %1793 = vmatprep.subr.mxu0 0.0
    %1794 = vmatpush1.msra.mxu0 0.0
    %1795 = vmatprep.subr.mxu0 0.0
    %1796 = vmatpush1.msra.mxu0 0.0
    %1797 = vmatprep.subr.mxu0 0.0
    %1798 = vmatpush1.msra.mxu0 0.0
    %1799 = vmatprep.subr.mxu0 0.0
    %1800 = vmatpush1.msra.mxu0 0.0
    %1801 = vmatprep.mubr.f32.mxu0 0.0
    %1802 = vmatmul.mubr.f32.gmra.mrb[0].mxu0 %v1735
    %v1803 = vpop.f32.mrb[0].mxu0
    %v1804 = vadd.f32 0.0, %v1803
    %v1805 = vpop.f32.mrb[0].mxu0
    %1806 = vdwg.mxu0
    %v1808 = vrot.slane %v1804, 2
    %v1810 = vadd.f32 %v143, %v1808
    %v1811 = vtanh.pop %v1810
    %v1812 = vmul.f32 %v1811, %v151
    %v1813 = vadd.f32 %v1812, %v152
    %v1815 = vrot.slane %v1720, 6
    %v1817 = vmul.f32 %v1813, %v1815
    %1819 = vrot.lane.b32.xlu0 %v1813, 64
    %v1820 = vpop.permute.xlu0 %1819
    %v1822 = vmul.f32 %v1813, %v1820
    %1824 = vrot.lane.b32.xlu0 %v1822, 32
    %v1825 = vpop.permute.xlu0 %1824
    %v1827 = vadd.f32 %v1817, %v1825
    %v1828 = vtanh.pop %v1827
    %1830 = vrot.lane.b32.xlu0 %v1828, 64
    %v1831 = vpop.permute.xlu0 %1830
    %v1833 = vmul.f32 %v1813, %v1831
    %1835 = vrot.lane.b32.xlu0 %v1833, 32
    %v1836 = vpop.permute.xlu0 %1835
    %1838 = vst.msk [vmem:[#allocation2 + $0x16] sm:$0xc0] %vm570, %v1836
    %v1839 = vld [vmem:[#allocation2] sm:$0xff]
    %v1840 = vld [vmem:[#allocation2 + $0x8] sm:$0xff]
    %v1841 = vld [vmem:[#allocation2 + $0x10] sm:$0xff]
    %v1842 = vld [vmem:[#allocation2 + $0x18] sm:$0x3f]
    %v1843 = vlaneseq
    %v1844 = vshrl.u32 %v1843, 7
    %v1845 = vsub.s32 0, %v1844
    %v1846 = vrot.slane %v35, %v1845
    %v1848 = vsel %vm153, %v1839, 0
    %v1851 = vsel %vm153, %v1840, 0
    %v1854 = vsel %vm153, %v1841, 0
    %v1857 = vsel %vm153, %v1842, 0
    %1859 = vmatprep.subr.mxu0 0.0
    %1860 = vmatpush1.msra.mxu0 %v29
    %1861 = vmatprep.subr.mxu0 0.0
    %1862 = vmatpush1.msra.mxu0 %v30
    %1863 = vmatprep.subr.mxu0 0.0
    %1864 = vmatpush1.msra.mxu0 %v31
    %1865 = vmatprep.subr.mxu0 0.0
    %1866 = vmatpush1.msra.mxu0 %v32
    %1867 = vmatprep.subr.mxu0 0.0
    %1868 = vmatpush1.msra.mxu0 0.0
    %1869 = vmatprep.subr.mxu0 0.0
    %1870 = vmatpush1.msra.mxu0 0.0
    %1871 = vmatprep.subr.mxu0 0.0
    %1872 = vmatpush1.msra.mxu0 0.0
    %1873 = vmatprep.subr.mxu0 0.0
    %1874 = vmatpush1.msra.mxu0 0.0
    %1875 = vmatprep.subr.mxu0 0.0
    %1876 = vmatpush1.msra.mxu0 0.0
    %1877 = vmatprep.subr.mxu0 0.0
    %1878 = vmatpush1.msra.mxu0 0.0
    %1879 = vmatprep.subr.mxu0 0.0
    %1880 = vmatpush1.msra.mxu0 0.0
    %1881 = vmatprep.subr.mxu0 0.0
    %1882 = vmatpush1.msra.mxu0 0.0
    %1883 = vmatprep.subr.mxu0 0.0
    %1884 = vmatpush1.msra.mxu0 0.0
    %1885 = vmatprep.subr.mxu0 0.0
    %1886 = vmatpush1.msra.mxu0 0.0
    %1887 = vmatprep.subr.mxu0 0.0
    %1888 = vmatpush1.msra.mxu0 0.0
    %1889 = vmatprep.subr.mxu0 0.0
    %1890 = vmatpush1.msra.mxu0 0.0
    %1891 = vmatprep.subr.mxu0 0.0
    %1892 = vmatpush1.msra.mxu0 0.0
    %1893 = vmatprep.subr.mxu0 0.0
    %1894 = vmatpush1.msra.mxu0 0.0
    %1895 = vmatprep.subr.mxu0 0.0
    %1896 = vmatpush1.msra.mxu0 0.0
    %1897 = vmatprep.subr.mxu0 0.0
    %1898 = vmatpush1.msra.mxu0 0.0
    %1899 = vmatprep.subr.mxu0 0.0
    %1900 = vmatpush1.msra.mxu0 0.0
    %1901 = vmatprep.subr.mxu0 0.0
    %1902 = vmatpush1.msra.mxu0 0.0
    %1903 = vmatprep.subr.mxu0 0.0
    %1904 = vmatpush1.msra.mxu0 0.0
    %1905 = vmatprep.subr.mxu0 0.0
    %1906 = vmatpush1.msra.mxu0 0.0
    %1907 = vmatprep.subr.mxu0 0.0
    %1908 = vmatpush1.msra.mxu0 0.0
    %1909 = vmatprep.subr.mxu0 0.0
    %1910 = vmatpush1.msra.mxu0 0.0
    %1911 = vmatprep.subr.mxu0 0.0
    %1912 = vmatpush1.msra.mxu0 0.0
    %1913 = vmatprep.subr.mxu0 0.0
    %1914 = vmatpush1.msra.mxu0 0.0
    %1915 = vmatprep.subr.mxu0 0.0
    %1916 = vmatpush1.msra.mxu0 0.0
    %1917 = vmatprep.subr.mxu0 0.0
    %1918 = vmatpush1.msra.mxu0 0.0
    %1919 = vmatprep.subr.mxu0 0.0
    %1920 = vmatpush1.msra.mxu0 0.0
    %1921 = vmatprep.subr.mxu0 0.0
    %1922 = vmatpush1.msra.mxu0 0.0
    %1923 = vmatprep.mubr.f32.mxu0 0.0
    %1924 = vmatmul.mubr.f32.gmra.mrb[0].mxu0 %v1848
    %v1925 = vpop.f32.mrb[0].mxu0
    %v1926 = vadd.f32 %v1846, %v1925
    %v1927 = vpop.f32.mrb[0].mxu0
    %1928 = vmatprep.mubr.f32.mxu0 0.0
    %1929 = vmatmul.mubr.f32.gmra.mrb[0].mxu0 %v1851
    %v1930 = vpop.f32.mrb[0].mxu0
    %v1931 = vadd.f32 %v1846, %v1930
    %v1932 = vpop.f32.mrb[0].mxu0
    %1933 = vmatprep.mubr.f32.mxu0 0.0
    %1934 = vmatmul.mubr.f32.gmra.mrb[0].mxu0 %v1854
    %v1935 = vpop.f32.mrb[0].mxu0
    %v1936 = vadd.f32 %v1846, %v1935
    %v1937 = vpop.f32.mrb[0].mxu0
    %1938 = vmatprep.mubr.f32.mxu0 0.0
    %1939 = vmatmul.mubr.f32.gmra.mrb[0].mxu0 %v1857
    %v1940 = vpop.f32.mrb[0].mxu0
    %v1941 = vadd.f32 %v1846, %v1940
    %v1942 = vpop.f32.mrb[0].mxu0
    %1943 = vdwg.mxu0
    %1944 = vst [vmem:[%s2] sm:$0xff] %v1926
    %1945 = vst [vmem:[%s2 + $0x8] sm:$0xff] %v1931
    %1946 = vst [vmem:[%s2 + $0x10] sm:$0xff] %v1936
    %1947 = vst [vmem:[%s2 + $0x18] sm:$0x3f] %v1941
    // Predicated region
    $region14: #{rnn_forward.1} parent=1 // pred_check
      _
    $region15: #{rnn_forward.1} parent=1 // pred_check_branch
      %1949 = sbr.rel (0) target = $region17
    $region16: #{rnn_forward.1} parent=1 // pred_region
      _
    $region17: #{rnn_forward.1} parent=1 // pred_fallthru
      _
    // Predicated region
    $region18: #{rnn_forward.1} parent=1 // pred_check
      _
    $region19: #{rnn_forward.1} parent=1 // pred_check_branch
      %1951 = sbr.rel (0) target = $region21
    $region20: #{rnn_forward.1} parent=1 // pred_region
      _
    $region21: #{rnn_forward.1} parent=1 // pred_fallthru
      _
    %1952 = vsyncpa [#allocation4], 1

</llo_original>
